<compile_context>
chip_gen: v6e
topology: v6e:2x2x1
jax: 0.10.0
libtpu: 0.0.40
codegen_flags: <defaults>
</compile_context>

<pallas_src>
import math

import jax
import jax.numpy as jnp
from jax import lax
from jax.experimental import pallas as pl
from jax.experimental.pallas import tpu as pltpu

_LANE = 128   # lane-dense padded width of the final output projection
_CHUNK = 8    # timesteps per front-end chunk (multiple of the int32 sublane tile)


def _round_up(x, m):
    return (x + m - 1) // m * m


def _make_kernel(s_true, chunk):
    """Kernel factory closing over the true sequence length and chunk size."""

    def kernel(tok_ref,                      # (S_pad, TB) int32 (this tile's rows)
               embw_ref, bp_ref,             # (V, P) bf16 / (1, P) f32
               wih_ref, blstm_ref,           # (P, 4H) bf16 / (1, 4H) f32 (bih+bhh)
               whh_ref,                      # (H, 4H) bf16
               w1_ref, b1_ref,
               w2_ref, b2_ref,
               w3_ref, b3_ref,
               wo_ref, bo_ref,               # (H, 128) bf16 / (1, 128) f32
               out_ref,                      # (TB, 128) f32
               xg_ref):                      # scratch (S_pad, TB, 4H) bf16
        S_pad, TB = tok_ref.shape
        V, _ = embw_ref.shape
        H = whh_ref.shape[0]
        n_chunks = S_pad // chunk

        def mm(x, w_ref):
            # bf16 MXU matmul, f32 accumulation; surrounding math stays f32.
            return jnp.dot(x.astype(jnp.bfloat16), w_ref[...],
                           preferred_element_type=jnp.float32)

        # ---- Front-end: embedding(one-hot) + projection + input-gate matmul,
        #      chunked over time so the live intermediates are one chunk only.
        #      embW := emb @ Wp was folded on the host, so
        #      x = ReLU(onehot @ embW + bp) == ReLU(emb[tok] @ Wp + bp).
        # TODO(synk): for a large vocabulary replace the one-hot matmul with a
        # DMA/dynamic-slice gather from an HBM-resident embedding table.
        def frontend(ci, carry):
            s0 = ci * chunk
            if n_chunks > 1:
                s0 = pl.multiple_of(s0, chunk)
            tok_c = tok_ref[pl.ds(s0, chunk), :]                      # (chunk, TB)
            onehot = (tok_c[:, :, None] ==
                      lax.broadcasted_iota(jnp.int32, (chunk, TB, V), 2))
            onehot = onehot.astype(jnp.bfloat16).reshape(chunk * TB, V)
            x = jnp.maximum(
                jnp.dot(onehot, embw_ref[...],
                        preferred_element_type=jnp.float32) + bp_ref[...], 0.0)
            xg = mm(x, wih_ref) + blstm_ref[...]                      # (chunk*TB, 4H)
            xg_ref[pl.ds(s0, chunk), :, :] = (
                xg.reshape(chunk, TB, 4 * H).astype(xg_ref.dtype))
            return carry

        if n_chunks == 1:
            frontend(0, 0)
        else:
            lax.fori_loop(0, n_chunks, frontend, 0)

        # ---- LSTM recurrence (single layer, unidirectional); gate order i,f,g,o.
        # TODO(synk): hold Whh in MXU weight registers across timesteps via
        # pltpu.matmul_push_rhs/matmul_acc_lhs/matmul_pop; n_layers>1 and
        # bidirectional variants not implemented.
        def step(t, carry):
            h, c = carry
            g = xg_ref[t].astype(jnp.float32) + mm(h, whh_ref)        # (TB, 4H)
            i = jax.nn.sigmoid(g[:, 0 * H:1 * H])
            f = jax.nn.sigmoid(g[:, 1 * H:2 * H])
            gg = jnp.tanh(g[:, 2 * H:3 * H])
            o = jax.nn.sigmoid(g[:, 3 * H:4 * H])
            c = f * c + i * gg
            h = o * jnp.tanh(c)
            return h, c

        zeros = jnp.zeros((TB, H), jnp.float32)
        h_last, _ = lax.fori_loop(0, s_true, step, (zeros, zeros),
                                  unroll=min(s_true, 8))

        # ---- MLP head (dropout = identity in eval).
        # TODO(synk): training-mode dropout (p=config.dp_ratio) not implemented.
        z = jnp.maximum(mm(h_last, w1_ref) + b1_ref[...], 0.0)
        z = jnp.maximum(mm(z, w2_ref) + b2_ref[...], 0.0)
        z = jnp.maximum(mm(z, w3_ref) + b3_ref[...], 0.0)

        # ---- Output projection (zero-padded to 128 lanes -> unmasked stores).
        out_ref[...] = jax.nn.sigmoid(mm(z, wo_ref) + bo_ref[...]).astype(out_ref.dtype)

    return kernel


def sequence_classifier(essay, params, *, d_out):
    """essay: (seq_len, batch) int32 token ids (time-major, PyTorch layout)."""
    S, B = essay.shape
    V = params["emb"].shape[0]
    P = params["wp"].shape[1]
    H = params["whh"].shape[0]
    S_pad = _round_up(S, _CHUNK)

    # ---- Host-side weight prep: fold embedding through projection in f32,
    #      cast once to bf16; pre-sum the two LSTM biases.
    embw = jnp.dot(params["emb"].astype(jnp.float32),
                   params["wp"].astype(jnp.float32)).astype(jnp.bfloat16)   # (V, P)
    blstm = (params["bih"] + params["bhh"]).astype(jnp.float32)             # (1, 4H)

    weight_args = (embw, params["bp"],
                   params["wih"], blstm, params["whh"],
                   params["w1"], params["b1"],
                   params["w2"], params["b2"],
                   params["w3"], params["b3"],
                   params["wo"], params["bo"])
    weight_bytes = sum(int(a.size) * a.dtype.itemsize for a in weight_args)

    # ---- Batch tile size from an explicit VMEM budget (binding on v7x: 64 MiB
    #      physical).  Per-batch-row bytes: bf16 xg scratch + double-buffered
    #      token / output tiles + live front-end chunk intermediates.
    per_row = (S_pad * 4 * H * 2                      # xg scratch (bf16)
               + 2 * S_pad * 4                        # token tile (int32), 2 bufs
               + 2 * _LANE * 4                        # output tile (f32), 2 bufs
               + _CHUNK * (2 * V + 4 * P + 16 * H))   # one-hot/x/xg per chunk
    budget = (40 << 20) - 2 * weight_bytes            # weights may be double-buffered
    tb_cap = max(8, min(256, budget // max(per_row, 1) // 8 * 8))

    if B < 16:
        TB = _round_up(B, 8)                          # tiny batch: one tile
    else:
        TB = _round_up((B + 1) // 2, 8)               # >=2 grid steps: v7x 2-TC split
    TB = max(8, min(TB, tb_cap))
    B_pad = _round_up(B, TB)
    n_tiles = B_pad // TB

    # ---- Tokens: pre-tiled, lane-dense int32 (n_tiles*S_pad, TB); batch tile b
    #      occupies rows [b*S_pad, (b+1)*S_pad).  No 128x singleton-lane padding.
    padded = jnp.pad(essay.astype(jnp.int32), ((0, S_pad - S), (0, B_pad - B)))
    tok = padded.reshape(S_pad, n_tiles, TB).transpose(1, 0, 2)
    tok = tok.reshape(n_tiles * S_pad, TB)

    def whole(a):
        # Whole-array block, constant index map: DMA'd once, VMEM-resident
        # across all batch-grid steps.
        # TODO(synk): pipeline_mode=pl.Buffered(1) would drop the redundant
        # second buffer of each grid-invariant weight on VMEM-tight configs.
        return pl.BlockSpec(a.shape, lambda b: (0, 0))

    grid_spec = pltpu.PrefetchScalarGridSpec(
        num_scalar_prefetch=0,
        grid=(n_tiles,),
        in_specs=[pl.BlockSpec((S_pad, TB), lambda b: (b, 0))]
                 + [whole(a) for a in weight_args],
        out_specs=pl.BlockSpec((TB, _LANE), lambda b: (b, 0)),
        scratch_shapes=[pltpu.VMEM((S_pad, TB, 4 * H), jnp.bfloat16)],
    )

    est_bytes = 2 * weight_bytes + TB * per_row
    vmem_limit = int(min(max(2 * est_bytes + (4 << 20), 32 << 20), 48 << 20))

    out = pl.pallas_call(
        _make_kernel(S, _CHUNK),
        out_shape=jax.ShapeDtypeStruct((B_pad, _LANE), jnp.float32),
        grid_spec=grid_spec,
        compiler_params=pltpu.CompilerParams(
            dimension_semantics=("parallel",),        # v7x: batch tiles over 2 TCs
            vmem_limit_bytes=vmem_limit),
    )(tok, *weight_args)

    return out[:B, :d_out]


def init_params(key, *, n_embed, d_embed, d_proj, d_hidden, d_out):
    """PyTorch-style init.  Embedding & projection kept f32 (folded once to a
    bf16 embW on the host); other matmul weights stored bf16; biases f32;
    output projection zero-padded to 128 lanes."""
    def uniform(k, shape, bound):
        return jax.random.uniform(k, shape, jnp.float32, -bound, bound)

    def linear_bf16(k, fan_in, fan_out):
        kw, kb = jax.random.split(k)
        bound = 1.0 / math.sqrt(fan_in)
        w = uniform(kw, (fan_in, fan_out), bound).astype(jnp.bfloat16)
        b = uniform(kb, (1, fan_out), bound)                         # f32
        return w, b

    ke, kp, ki, kh, k1, k2, k3, ko = jax.random.split(key, 8)

    emb = jax.random.normal(ke, (n_embed, d_embed), jnp.float32)
    kpw, kpb = jax.random.split(kp)
    bound = 1.0 / math.sqrt(d_embed)
    wp = uniform(kpw, (d_embed, d_proj), bound)                      # f32 (folded)
    bp = uniform(kpb, (1, d_proj), bound)

    bound = 1.0 / math.sqrt(d_hidden)
    kiw, kib = jax.random.split(ki)
    khw, khb = jax.random.split(kh)
    wih = uniform(kiw, (d_proj, 4 * d_hidden), bound).astype(jnp.bfloat16)
    bih = uniform(kib, (1, 4 * d_hidden), bound)
    whh = uniform(khw, (d_hidden, 4 * d_hidden), bound).astype(jnp.bfloat16)
    bhh = uniform(khb, (1, 4 * d_hidden), bound)

    w1, b1 = linear_bf16(k1, d_hidden, d_hidden)
    w2, b2 = linear_bf16(k2, d_hidden, d_hidden)
    w3, b3 = linear_bf16(k3, d_hidden, d_hidden)

    wo_r, bo_r = linear_bf16(ko, d_hidden, d_out)
    wo = jnp.zeros((d_hidden, _LANE), jnp.bfloat16).at[:, :d_out].set(wo_r)
    bo = jnp.zeros((1, _LANE), jnp.float32).at[:, :d_out].set(bo_r)

    return dict(emb=emb, wp=wp, bp=bp, wih=wih, bih=bih, whh=whh, bhh=bhh,
                w1=w1, b1=b1, w2=w2, b2=b2, w3=w3, b3=b3, wo=wo, bo=bo)


def reference(essay, params, *, d_out):
    """Plain-JAX reference for the module's eval-mode forward, mirroring the
    kernel's numeric policy (bf16 matmul inputs, f32 accumulation, host-folded
    bf16 embW = emb @ Wp); gate pre-activations stay f32 here."""
    S, B = essay.shape
    H = params["whh"].shape[0]

    def mm(x, w):
        return jnp.dot(x.astype(jnp.bfloat16), w, preferred_element_type=jnp.float32)

    embw = jnp.dot(params["emb"].astype(jnp.float32),
                   params["wp"].astype(jnp.float32)).astype(jnp.bfloat16)
    blstm = params["bih"] + params["bhh"]

    x = jnp.maximum(embw[essay].astype(jnp.float32).reshape(S * B, -1)
                    + params["bp"], 0.0)
    xg = (mm(x, params["wih"]) + blstm).reshape(S, B, 4 * H)

    h = jnp.zeros((B, H), jnp.float32)
    c = jnp.zeros((B, H), jnp.float32)
    for t in range(S):
        g = xg[t] + mm(h, params["whh"])
        i = jax.nn.sigmoid(g[:, :H])
        f = jax.nn.sigmoid(g[:, H:2 * H])
        gg = jnp.tanh(g[:, 2 * H:3 * H])
        o = jax.nn.sigmoid(g[:, 3 * H:])
        c = f * c + i * gg
        h = o * jnp.tanh(c)

    z = jnp.maximum(mm(h, params["w1"]) + params["b1"], 0.0)
    z = jnp.maximum(mm(z, params["w2"]) + params["b2"], 0.0)
    z = jnp.maximum(mm(z, params["w3"]) + params["b3"], 0.0)
    s = jax.nn.sigmoid(mm(z, params["wo"]) + params["bo"])
    return s[:, :d_out]


if __name__ == "__main__":
    # Small config consistent with the module:
    #   n_embed(vocab)=64, d_embed=32, projection=True (d_proj=32),
    #   d_hidden=128, n_layers=1, birnn=False, d_out=8, seq_len=8, batch=8,
    #   eval mode (dropout = identity).
    n_embed, d_embed, d_proj, d_hidden, d_out = 64, 32, 32, 128, 8
    seq_len, batch = 8, 8

    key = jax.random.PRNGKey(0)
    k_tok, k_par = jax.random.split(key)
    essay = jax.random.randint(k_tok, (seq_len, batch), 0, n_embed, jnp.int32)
    params = init_params(k_par, n_embed=n_embed, d_embed=d_embed, d_proj=d_proj,
                         d_hidden=d_hidden, d_out=d_out)

    scores = sequence_classifier(essay, params, d_out=d_out)
    scores = jax.block_until_ready(scores)

    ref = reference(essay, params, d_out=d_out)
    assert scores.shape == (batch, d_out)
    err = float(jnp.max(jnp.abs(scores - ref)))
    assert jnp.allclose(scores, ref, atol=1e-2, rtol=1e-2), err

    print("KERNEL_OK")
</pallas_src>

<mosaic_0001>
module attributes {stable_mosaic.version = 11 : i64} {
  func.func @kernel(%arg0: i32, %arg1: memref<8x8xi32, #tpu.memory_space<vmem>>, %arg2: memref<64x32xbf16, #tpu.memory_space<vmem>>, %arg3: memref<1x32xf32, #tpu.memory_space<vmem>>, %arg4: memref<32x512xbf16, #tpu.memory_space<vmem>>, %arg5: memref<1x512xf32, #tpu.memory_space<vmem>>, %arg6: memref<128x512xbf16, #tpu.memory_space<vmem>>, %arg7: memref<128x128xbf16, #tpu.memory_space<vmem>>, %arg8: memref<1x128xf32, #tpu.memory_space<vmem>>, %arg9: memref<128x128xbf16, #tpu.memory_space<vmem>>, %arg10: memref<1x128xf32, #tpu.memory_space<vmem>>, %arg11: memref<128x128xbf16, #tpu.memory_space<vmem>>, %arg12: memref<1x128xf32, #tpu.memory_space<vmem>>, %arg13: memref<128x128xbf16, #tpu.memory_space<vmem>>, %arg14: memref<1x128xf32, #tpu.memory_space<vmem>>, %arg15: memref<8x128xf32, #tpu.memory_space<vmem>>, %arg16: memref<8x8x512xbf16, #tpu.memory_space<vmem>>) attributes {dimension_semantics = [#tpu.dimension_semantics<parallel>], iteration_bounds = array<i64: 1>, scalar_prefetch = 0 : i64, scratch_operands = 1 : i64, tpu.core_type = #tpu.core_type<tc>, window_params = [{transform_indices = @transform_0, window_bounds = array<i64: 8, 8>}, {pipeline_mode = #tpu.pipeline_mode<synchronous>, transform_indices = @transform_1, window_bounds = array<i64: 64, 32>}, {pipeline_mode = #tpu.pipeline_mode<synchronous>, transform_indices = @transform_2, window_bounds = array<i64: 1, 32>}, {pipeline_mode = #tpu.pipeline_mode<synchronous>, transform_indices = @transform_3, window_bounds = array<i64: 32, 512>}, {pipeline_mode = #tpu.pipeline_mode<synchronous>, transform_indices = @transform_4, window_bounds = array<i64: 1, 512>}, {pipeline_mode = #tpu.pipeline_mode<synchronous>, transform_indices = @transform_5, window_bounds = array<i64: 128, 512>}, {pipeline_mode = #tpu.pipeline_mode<synchronous>, transform_indices = @transform_6, window_bounds = array<i64: 128, 128>}, {pipeline_mode = #tpu.pipeline_mode<synchronous>, transform_indices = @transform_7, window_bounds = array<i64: 1, 128>}, {pipeline_mode = #tpu.pipeline_mode<synchronous>, transform_indices = @transform_8, window_bounds = array<i64: 128, 128>}, {pipeline_mode = #tpu.pipeline_mode<synchronous>, transform_indices = @transform_9, window_bounds = array<i64: 1, 128>}, {pipeline_mode = #tpu.pipeline_mode<synchronous>, transform_indices = @transform_10, window_bounds = array<i64: 128, 128>}, {pipeline_mode = #tpu.pipeline_mode<synchronous>, transform_indices = @transform_11, window_bounds = array<i64: 1, 128>}, {pipeline_mode = #tpu.pipeline_mode<synchronous>, transform_indices = @transform_12, window_bounds = array<i64: 128, 128>}, {pipeline_mode = #tpu.pipeline_mode<synchronous>, transform_indices = @transform_13, window_bounds = array<i64: 1, 128>}, {transform_indices = @transform_14, window_bounds = array<i64: 8, 128>}]} {
    %c0 = arith.constant 0 : index
    %c0_0 = arith.constant 0 : index
    %0 = vector.load %arg1[%c0, %c0_0] : memref<8x8xi32, #tpu.memory_space<vmem>>, vector<8x8xi32>
    %1 = vector.shape_cast %0 : vector<8x8xi32> to vector<8x8x1xi32>
    %2 = tpu.iota {dimensions = array<i32: 2>} : vector<8x8x64xi32>
    %3 = vector.broadcast %1 : vector<8x8x1xi32> to vector<8x8x64xi32>
    %4 = arith.cmpi eq, %3, %2 : vector<8x8x64xi32>
    %5 = arith.extui %4 : vector<8x8x64xi1> to vector<8x8x64xi32>
    %6 = arith.sitofp %5 : vector<8x8x64xi32> to vector<8x8x64xf32>
    %7 = arith.truncf %6 : vector<8x8x64xf32> to vector<8x8x64xbf16>
    %8 = vector.shape_cast %7 : vector<8x8x64xbf16> to vector<64x64xbf16>
    %c0_1 = arith.constant 0 : index
    %c0_2 = arith.constant 0 : index
    %9 = vector.load %arg2[%c0_1, %c0_2] : memref<64x32xbf16, #tpu.memory_space<vmem>>, vector<64x32xbf16>
    %cst = arith.constant dense<0.000000e+00> : vector<64x32xf32>
    %10 = tpu.matmul %8, %9, %cst {dimension_numbers = #tpu.dot_dimension_numbers<[1], [0], [0], [1], [0, 0, 1, 1], [], []>} : vector<64x64xbf16>, vector<64x32xbf16>, vector<64x32xf32> -> vector<64x32xf32>
    %c0_3 = arith.constant 0 : index
    %c0_4 = arith.constant 0 : index
    %11 = vector.load %arg3[%c0_3, %c0_4] : memref<1x32xf32, #tpu.memory_space<vmem>>, vector<1x32xf32>
    %12 = vector.broadcast %11 : vector<1x32xf32> to vector<64x32xf32>
    %13 = arith.addf %10, %12 : vector<64x32xf32>
    %cst_5 = arith.constant 0.000000e+00 : f32
    %14 = vector.broadcast %cst_5 : f32 to vector<64x32xf32>
    %15 = arith.maximumf %13, %14 : vector<64x32xf32>
    %16 = arith.truncf %15 : vector<64x32xf32> to vector<64x32xbf16>
    %c0_6 = arith.constant 0 : index
    %c0_7 = arith.constant 0 : index
    %17 = vector.load %arg4[%c0_6, %c0_7] : memref<32x512xbf16, #tpu.memory_space<vmem>>, vector<32x512xbf16>
    %cst_8 = arith.constant dense<0.000000e+00> : vector<64x512xf32>
    %18 = tpu.matmul %16, %17, %cst_8 {dimension_numbers = #tpu.dot_dimension_numbers<[1], [0], [0], [1], [0, 0, 1, 1], [], []>} : vector<64x32xbf16>, vector<32x512xbf16>, vector<64x512xf32> -> vector<64x512xf32>
    %c0_9 = arith.constant 0 : index
    %c0_10 = arith.constant 0 : index
    %19 = vector.load %arg5[%c0_9, %c0_10] : memref<1x512xf32, #tpu.memory_space<vmem>>, vector<1x512xf32>
    %20 = vector.broadcast %19 : vector<1x512xf32> to vector<64x512xf32>
    %21 = arith.addf %18, %20 : vector<64x512xf32>
    %22 = vector.shape_cast %21 : vector<64x512xf32> to vector<8x8x512xf32>
    %23 = arith.truncf %22 : vector<8x8x512xf32> to vector<8x8x512xbf16>
    %c0_11 = arith.constant 0 : index
    %c0_12 = arith.constant 0 : index
    %c0_13 = arith.constant 0 : index
    %24 = vector.load %arg16[%c0_11, %c0_12, %c0_13] : memref<8x8x512xbf16, #tpu.memory_space<vmem>>, vector<8x8x512xbf16>
    tpu.vector_store %arg16[%c0_11, %c0_12, %c0_13], %23 {strides = array<i32>} : memref<8x8x512xbf16, #tpu.memory_space<vmem>>, vector<8x8x512xbf16>,
    %cst_14 = arith.constant 0.000000e+00 : f32
    %25 = vector.broadcast %cst_14 : f32 to vector<8x128xf32>
    %c0_i32 = arith.constant 0 : i32
    %26 = arith.index_cast %c0_i32 : i32 to index
    %c0_15 = arith.constant 0 : index
    %c0_16 = arith.constant 0 : index
    %27 = vector.load %arg16[%26, %c0_15, %c0_16] : memref<8x8x512xbf16, #tpu.memory_space<vmem>>, vector<1x8x512xbf16>
    %28 = vector.shape_cast %27 : vector<1x8x512xbf16> to vector<8x512xbf16>
    %29 = arith.extf %28 : vector<8x512xbf16> to vector<8x512xf32>
    %30 = arith.truncf %25 : vector<8x128xf32> to vector<8x128xbf16>
    %c0_17 = arith.constant 0 : index
    %c0_18 = arith.constant 0 : index
    %31 = vector.load %arg6[%c0_17, %c0_18] : memref<128x512xbf16, #tpu.memory_space<vmem>>, vector<128x512xbf16>
    %cst_19 = arith.constant dense<0.000000e+00> : vector<8x512xf32>
    %32 = tpu.matmul %30, %31, %cst_19 {dimension_numbers = #tpu.dot_dimension_numbers<[1], [0], [0], [1], [0, 0, 1, 1], [], []>} : vector<8x128xbf16>, vector<128x512xbf16>, vector<8x512xf32> -> vector<8x512xf32>
    %33 = arith.addf %29, %32 : vector<8x512xf32>
    %34 = vector.extract_strided_slice %33 {offsets = [0, 0], sizes = [8, 128], strides = [1, 1]} : vector<8x512xf32> to vector<8x128xf32>
    %35 = arith.negf %34 : vector<8x128xf32>
    %36 = math.exp %35 : vector<8x128xf32>
    %cst_20 = arith.constant 1.000000e+00 : f32
    %37 = vector.broadcast %cst_20 : f32 to vector<8x128xf32>
    %38 = arith.addf %37, %36 : vector<8x128xf32>
    %39 = arith.divf %37, %38 : vector<8x128xf32>
    %40 = vector.extract_strided_slice %33 {offsets = [0, 128], sizes = [8, 128], strides = [1, 1]} : vector<8x512xf32> to vector<8x128xf32>
    %41 = arith.negf %40 : vector<8x128xf32>
    %42 = math.exp %41 : vector<8x128xf32>
    %cst_21 = arith.constant 1.000000e+00 : f32
    %43 = vector.broadcast %cst_21 : f32 to vector<8x128xf32>
    %44 = arith.addf %43, %42 : vector<8x128xf32>
    %45 = arith.divf %43, %44 : vector<8x128xf32>
    %46 = vector.extract_strided_slice %33 {offsets = [0, 256], sizes = [8, 128], strides = [1, 1]} : vector<8x512xf32> to vector<8x128xf32>
    %47 = math.tanh %46 : vector<8x128xf32>
    %48 = vector.extract_strided_slice %33 {offsets = [0, 384], sizes = [8, 128], strides = [1, 1]} : vector<8x512xf32> to vector<8x128xf32>
    %49 = arith.negf %48 : vector<8x128xf32>
    %50 = math.exp %49 : vector<8x128xf32>
    %cst_22 = arith.constant 1.000000e+00 : f32
    %51 = vector.broadcast %cst_22 : f32 to vector<8x128xf32>
    %52 = arith.addf %51, %50 : vector<8x128xf32>
    %53 = arith.divf %51, %52 : vector<8x128xf32>
    %54 = arith.mulf %45, %25 : vector<8x128xf32>
    %55 = arith.mulf %39, %47 : vector<8x128xf32>
    %56 = arith.addf %54, %55 : vector<8x128xf32>
    %57 = math.tanh %56 : vector<8x128xf32>
    %58 = arith.mulf %53, %57 : vector<8x128xf32>
    %c1_i32 = arith.constant 1 : i32
    %59 = arith.index_cast %c1_i32 : i32 to index
    %c0_23 = arith.constant 0 : index
    %c0_24 = arith.constant 0 : index
    %60 = vector.load %arg16[%59, %c0_23, %c0_24] : memref<8x8x512xbf16, #tpu.memory_space<vmem>>, vector<1x8x512xbf16>
    %61 = vector.shape_cast %60 : vector<1x8x512xbf16> to vector<8x512xbf16>
    %62 = arith.extf %61 : vector<8x512xbf16> to vector<8x512xf32>
    %63 = arith.truncf %58 : vector<8x128xf32> to vector<8x128xbf16>
    %c0_25 = arith.constant 0 : index
    %c0_26 = arith.constant 0 : index
    %64 = vector.load %arg6[%c0_25, %c0_26] : memref<128x512xbf16, #tpu.memory_space<vmem>>, vector<128x512xbf16>
    %cst_27 = arith.constant dense<0.000000e+00> : vector<8x512xf32>
    %65 = tpu.matmul %63, %64, %cst_27 {dimension_numbers = #tpu.dot_dimension_numbers<[1], [0], [0], [1], [0, 0, 1, 1], [], []>} : vector<8x128xbf16>, vector<128x512xbf16>, vector<8x512xf32> -> vector<8x512xf32>
    %66 = arith.addf %62, %65 : vector<8x512xf32>
    %67 = vector.extract_strided_slice %66 {offsets = [0, 0], sizes = [8, 128], strides = [1, 1]} : vector<8x512xf32> to vector<8x128xf32>
    %68 = arith.negf %67 : vector<8x128xf32>
    %69 = math.exp %68 : vector<8x128xf32>
    %cst_28 = arith.constant 1.000000e+00 : f32
    %70 = vector.broadcast %cst_28 : f32 to vector<8x128xf32>
    %71 = arith.addf %70, %69 : vector<8x128xf32>
    %72 = arith.divf %70, %71 : vector<8x128xf32>
    %73 = vector.extract_strided_slice %66 {offsets = [0, 128], sizes = [8, 128], strides = [1, 1]} : vector<8x512xf32> to vector<8x128xf32>
    %74 = arith.negf %73 : vector<8x128xf32>
    %75 = math.exp %74 : vector<8x128xf32>
    %cst_29 = arith.constant 1.000000e+00 : f32
    %76 = vector.broadcast %cst_29 : f32 to vector<8x128xf32>
    %77 = arith.addf %76, %75 : vector<8x128xf32>
    %78 = arith.divf %76, %77 : vector<8x128xf32>
    %79 = vector.extract_strided_slice %66 {offsets = [0, 256], sizes = [8, 128], strides = [1, 1]} : vector<8x512xf32> to vector<8x128xf32>
    %80 = math.tanh %79 : vector<8x128xf32>
    %81 = vector.extract_strided_slice %66 {offsets = [0, 384], sizes = [8, 128], strides = [1, 1]} : vector<8x512xf32> to vector<8x128xf32>
    %82 = arith.negf %81 : vector<8x128xf32>
    %83 = math.exp %82 : vector<8x128xf32>
    %cst_30 = arith.constant 1.000000e+00 : f32
    %84 = vector.broadcast %cst_30 : f32 to vector<8x128xf32>
    %85 = arith.addf %84, %83 : vector<8x128xf32>
    %86 = arith.divf %84, %85 : vector<8x128xf32>
    %87 = arith.mulf %78, %56 : vector<8x128xf32>
    %88 = arith.mulf %72, %80 : vector<8x128xf32>
    %89 = arith.addf %87, %88 : vector<8x128xf32>
    %90 = math.tanh %89 : vector<8x128xf32>
    %91 = arith.mulf %86, %90 : vector<8x128xf32>
    %c2_i32 = arith.constant 2 : i32
    %92 = arith.index_cast %c2_i32 : i32 to index
    %c0_31 = arith.constant 0 : index
    %c0_32 = arith.constant 0 : index
    %93 = vector.load %arg16[%92, %c0_31, %c0_32] : memref<8x8x512xbf16, #tpu.memory_space<vmem>>, vector<1x8x512xbf16>
    %94 = vector.shape_cast %93 : vector<1x8x512xbf16> to vector<8x512xbf16>
    %95 = arith.extf %94 : vector<8x512xbf16> to vector<8x512xf32>
    %96 = arith.truncf %91 : vector<8x128xf32> to vector<8x128xbf16>
    %c0_33 = arith.constant 0 : index
    %c0_34 = arith.constant 0 : index
    %97 = vector.load %arg6[%c0_33, %c0_34] : memref<128x512xbf16, #tpu.memory_space<vmem>>, vector<128x512xbf16>
    %cst_35 = arith.constant dense<0.000000e+00> : vector<8x512xf32>
    %98 = tpu.matmul %96, %97, %cst_35 {dimension_numbers = #tpu.dot_dimension_numbers<[1], [0], [0], [1], [0, 0, 1, 1], [], []>} : vector<8x128xbf16>, vector<128x512xbf16>, vector<8x512xf32> -> vector<8x512xf32>
    %99 = arith.addf %95, %98 : vector<8x512xf32>
    %100 = vector.extract_strided_slice %99 {offsets = [0, 0], sizes = [8, 128], strides = [1, 1]} : vector<8x512xf32> to vector<8x128xf32>
    %101 = arith.negf %100 : vector<8x128xf32>
    %102 = math.exp %101 : vector<8x128xf32>
    %cst_36 = arith.constant 1.000000e+00 : f32
    %103 = vector.broadcast %cst_36 : f32 to vector<8x128xf32>
    %104 = arith.addf %103, %102 : vector<8x128xf32>
    %105 = arith.divf %103, %104 : vector<8x128xf32>
    %106 = vector.extract_strided_slice %99 {offsets = [0, 128], sizes = [8, 128], strides = [1, 1]} : vector<8x512xf32> to vector<8x128xf32>
    %107 = arith.negf %106 : vector<8x128xf32>
    %108 = math.exp %107 : vector<8x128xf32>
    %cst_37 = arith.constant 1.000000e+00 : f32
    %109 = vector.broadcast %cst_37 : f32 to vector<8x128xf32>
    %110 = arith.addf %109, %108 : vector<8x128xf32>
    %111 = arith.divf %109, %110 : vector<8x128xf32>
    %112 = vector.extract_strided_slice %99 {offsets = [0, 256], sizes = [8, 128], strides = [1, 1]} : vector<8x512xf32> to vector<8x128xf32>
    %113 = math.tanh %112 : vector<8x128xf32>
    %114 = vector.extract_strided_slice %99 {offsets = [0, 384], sizes = [8, 128], strides = [1, 1]} : vector<8x512xf32> to vector<8x128xf32>
    %115 = arith.negf %114 : vector<8x128xf32>
    %116 = math.exp %115 : vector<8x128xf32>
    %cst_38 = arith.constant 1.000000e+00 : f32
    %117 = vector.broadcast %cst_38 : f32 to vector<8x128xf32>
    %118 = arith.addf %117, %116 : vector<8x128xf32>
    %119 = arith.divf %117, %118 : vector<8x128xf32>
    %120 = arith.mulf %111, %89 : vector<8x128xf32>
    %121 = arith.mulf %105, %113 : vector<8x128xf32>
    %122 = arith.addf %120, %121 : vector<8x128xf32>
    %123 = math.tanh %122 : vector<8x128xf32>
    %124 = arith.mulf %119, %123 : vector<8x128xf32>
    %c3_i32 = arith.constant 3 : i32
    %125 = arith.index_cast %c3_i32 : i32 to index
    %c0_39 = arith.constant 0 : index
    %c0_40 = arith.constant 0 : index
    %126 = vector.load %arg16[%125, %c0_39, %c0_40] : memref<8x8x512xbf16, #tpu.memory_space<vmem>>, vector<1x8x512xbf16>
    %127 = vector.shape_cast %126 : vector<1x8x512xbf16> to vector<8x512xbf16>
    %128 = arith.extf %127 : vector<8x512xbf16> to vector<8x512xf32>
    %129 = arith.truncf %124 : vector<8x128xf32> to vector<8x128xbf16>
    %c0_41 = arith.constant 0 : index
    %c0_42 = arith.constant 0 : index
    %130 = vector.load %arg6[%c0_41, %c0_42] : memref<128x512xbf16, #tpu.memory_space<vmem>>, vector<128x512xbf16>
    %cst_43 = arith.constant dense<0.000000e+00> : vector<8x512xf32>
    %131 = tpu.matmul %129, %130, %cst_43 {dimension_numbers = #tpu.dot_dimension_numbers<[1], [0], [0], [1], [0, 0, 1, 1], [], []>} : vector<8x128xbf16>, vector<128x512xbf16>, vector<8x512xf32> -> vector<8x512xf32>
    %132 = arith.addf %128, %131 : vector<8x512xf32>
    %133 = vector.extract_strided_slice %132 {offsets = [0, 0], sizes = [8, 128], strides = [1, 1]} : vector<8x512xf32> to vector<8x128xf32>
    %134 = arith.negf %133 : vector<8x128xf32>
    %135 = math.exp %134 : vector<8x128xf32>
    %cst_44 = arith.constant 1.000000e+00 : f32
    %136 = vector.broadcast %cst_44 : f32 to vector<8x128xf32>
    %137 = arith.addf %136, %135 : vector<8x128xf32>
    %138 = arith.divf %136, %137 : vector<8x128xf32>
    %139 = vector.extract_strided_slice %132 {offsets = [0, 128], sizes = [8, 128], strides = [1, 1]} : vector<8x512xf32> to vector<8x128xf32>
    %140 = arith.negf %139 : vector<8x128xf32>
    %141 = math.exp %140 : vector<8x128xf32>
    %cst_45 = arith.constant 1.000000e+00 : f32
    %142 = vector.broadcast %cst_45 : f32 to vector<8x128xf32>
    %143 = arith.addf %142, %141 : vector<8x128xf32>
    %144 = arith.divf %142, %143 : vector<8x128xf32>
    %145 = vector.extract_strided_slice %132 {offsets = [0, 256], sizes = [8, 128], strides = [1, 1]} : vector<8x512xf32> to vector<8x128xf32>
    %146 = math.tanh %145 : vector<8x128xf32>
    %147 = vector.extract_strided_slice %132 {offsets = [0, 384], sizes = [8, 128], strides = [1, 1]} : vector<8x512xf32> to vector<8x128xf32>
    %148 = arith.negf %147 : vector<8x128xf32>
    %149 = math.exp %148 : vector<8x128xf32>
    %cst_46 = arith.constant 1.000000e+00 : f32
    %150 = vector.broadcast %cst_46 : f32 to vector<8x128xf32>
    %151 = arith.addf %150, %149 : vector<8x128xf32>
    %152 = arith.divf %150, %151 : vector<8x128xf32>
    %153 = arith.mulf %144, %122 : vector<8x128xf32>
    %154 = arith.mulf %138, %146 : vector<8x128xf32>
    %155 = arith.addf %153, %154 : vector<8x128xf32>
    %156 = math.tanh %155 : vector<8x128xf32>
    %157 = arith.mulf %152, %156 : vector<8x128xf32>
    %c4_i32 = arith.constant 4 : i32
    %158 = arith.index_cast %c4_i32 : i32 to index
    %c0_47 = arith.constant 0 : index
    %c0_48 = arith.constant 0 : index
    %159 = vector.load %arg16[%158, %c0_47, %c0_48] : memref<8x8x512xbf16, #tpu.memory_space<vmem>>, vector<1x8x512xbf16>
    %160 = vector.shape_cast %159 : vector<1x8x512xbf16> to vector<8x512xbf16>
    %161 = arith.extf %160 : vector<8x512xbf16> to vector<8x512xf32>
    %162 = arith.truncf %157 : vector<8x128xf32> to vector<8x128xbf16>
    %c0_49 = arith.constant 0 : index
    %c0_50 = arith.constant 0 : index
    %163 = vector.load %arg6[%c0_49, %c0_50] : memref<128x512xbf16, #tpu.memory_space<vmem>>, vector<128x512xbf16>
    %cst_51 = arith.constant dense<0.000000e+00> : vector<8x512xf32>
    %164 = tpu.matmul %162, %163, %cst_51 {dimension_numbers = #tpu.dot_dimension_numbers<[1], [0], [0], [1], [0, 0, 1, 1], [], []>} : vector<8x128xbf16>, vector<128x512xbf16>, vector<8x512xf32> -> vector<8x512xf32>
    %165 = arith.addf %161, %164 : vector<8x512xf32>
    %166 = vector.extract_strided_slice %165 {offsets = [0, 0], sizes = [8, 128], strides = [1, 1]} : vector<8x512xf32> to vector<8x128xf32>
    %167 = arith.negf %166 : vector<8x128xf32>
    %168 = math.exp %167 : vector<8x128xf32>
    %cst_52 = arith.constant 1.000000e+00 : f32
    %169 = vector.broadcast %cst_52 : f32 to vector<8x128xf32>
    %170 = arith.addf %169, %168 : vector<8x128xf32>
    %171 = arith.divf %169, %170 : vector<8x128xf32>
    %172 = vector.extract_strided_slice %165 {offsets = [0, 128], sizes = [8, 128], strides = [1, 1]} : vector<8x512xf32> to vector<8x128xf32>
    %173 = arith.negf %172 : vector<8x128xf32>
    %174 = math.exp %173 : vector<8x128xf32>
    %cst_53 = arith.constant 1.000000e+00 : f32
    %175 = vector.broadcast %cst_53 : f32 to vector<8x128xf32>
    %176 = arith.addf %175, %174 : vector<8x128xf32>
    %177 = arith.divf %175, %176 : vector<8x128xf32>
    %178 = vector.extract_strided_slice %165 {offsets = [0, 256], sizes = [8, 128], strides = [1, 1]} : vector<8x512xf32> to vector<8x128xf32>
    %179 = math.tanh %178 : vector<8x128xf32>
    %180 = vector.extract_strided_slice %165 {offsets = [0, 384], sizes = [8, 128], strides = [1, 1]} : vector<8x512xf32> to vector<8x128xf32>
    %181 = arith.negf %180 : vector<8x128xf32>
    %182 = math.exp %181 : vector<8x128xf32>
    %cst_54 = arith.constant 1.000000e+00 : f32
    %183 = vector.broadcast %cst_54 : f32 to vector<8x128xf32>
    %184 = arith.addf %183, %182 : vector<8x128xf32>
    %185 = arith.divf %183, %184 : vector<8x128xf32>
    %186 = arith.mulf %177, %155 : vector<8x128xf32>
    %187 = arith.mulf %171, %179 : vector<8x128xf32>
    %188 = arith.addf %186, %187 : vector<8x128xf32>
    %189 = math.tanh %188 : vector<8x128xf32>
    %190 = arith.mulf %185, %189 : vector<8x128xf32>
    %c5_i32 = arith.constant 5 : i32
    %191 = arith.index_cast %c5_i32 : i32 to index
    %c0_55 = arith.constant 0 : index
    %c0_56 = arith.constant 0 : index
    %192 = vector.load %arg16[%191, %c0_55, %c0_56] : memref<8x8x512xbf16, #tpu.memory_space<vmem>>, vector<1x8x512xbf16>
    %193 = vector.shape_cast %192 : vector<1x8x512xbf16> to vector<8x512xbf16>
    %194 = arith.extf %193 : vector<8x512xbf16> to vector<8x512xf32>
    %195 = arith.truncf %190 : vector<8x128xf32> to vector<8x128xbf16>
    %c0_57 = arith.constant 0 : index
    %c0_58 = arith.constant 0 : index
    %196 = vector.load %arg6[%c0_57, %c0_58] : memref<128x512xbf16, #tpu.memory_space<vmem>>, vector<128x512xbf16>
    %cst_59 = arith.constant dense<0.000000e+00> : vector<8x512xf32>
    %197 = tpu.matmul %195, %196, %cst_59 {dimension_numbers = #tpu.dot_dimension_numbers<[1], [0], [0], [1], [0, 0, 1, 1], [], []>} : vector<8x128xbf16>, vector<128x512xbf16>, vector<8x512xf32> -> vector<8x512xf32>
    %198 = arith.addf %194, %197 : vector<8x512xf32>
    %199 = vector.extract_strided_slice %198 {offsets = [0, 0], sizes = [8, 128], strides = [1, 1]} : vector<8x512xf32> to vector<8x128xf32>
    %200 = arith.negf %199 : vector<8x128xf32>
    %201 = math.exp %200 : vector<8x128xf32>
    %cst_60 = arith.constant 1.000000e+00 : f32
    %202 = vector.broadcast %cst_60 : f32 to vector<8x128xf32>
    %203 = arith.addf %202, %201 : vector<8x128xf32>
    %204 = arith.divf %202, %203 : vector<8x128xf32>
    %205 = vector.extract_strided_slice %198 {offsets = [0, 128], sizes = [8, 128], strides = [1, 1]} : vector<8x512xf32> to vector<8x128xf32>
    %206 = arith.negf %205 : vector<8x128xf32>
    %207 = math.exp %206 : vector<8x128xf32>
    %cst_61 = arith.constant 1.000000e+00 : f32
    %208 = vector.broadcast %cst_61 : f32 to vector<8x128xf32>
    %209 = arith.addf %208, %207 : vector<8x128xf32>
    %210 = arith.divf %208, %209 : vector<8x128xf32>
    %211 = vector.extract_strided_slice %198 {offsets = [0, 256], sizes = [8, 128], strides = [1, 1]} : vector<8x512xf32> to vector<8x128xf32>
    %212 = math.tanh %211 : vector<8x128xf32>
    %213 = vector.extract_strided_slice %198 {offsets = [0, 384], sizes = [8, 128], strides = [1, 1]} : vector<8x512xf32> to vector<8x128xf32>
    %214 = arith.negf %213 : vector<8x128xf32>
    %215 = math.exp %214 : vector<8x128xf32>
    %cst_62 = arith.constant 1.000000e+00 : f32
    %216 = vector.broadcast %cst_62 : f32 to vector<8x128xf32>
    %217 = arith.addf %216, %215 : vector<8x128xf32>
    %218 = arith.divf %216, %217 : vector<8x128xf32>
    %219 = arith.mulf %210, %188 : vector<8x128xf32>
    %220 = arith.mulf %204, %212 : vector<8x128xf32>
    %221 = arith.addf %219, %220 : vector<8x128xf32>
    %222 = math.tanh %221 : vector<8x128xf32>
    %223 = arith.mulf %218, %222 : vector<8x128xf32>
    %c6_i32 = arith.constant 6 : i32
    %224 = arith.index_cast %c6_i32 : i32 to index
    %c0_63 = arith.constant 0 : index
    %c0_64 = arith.constant 0 : index
    %225 = vector.load %arg16[%224, %c0_63, %c0_64] : memref<8x8x512xbf16, #tpu.memory_space<vmem>>, vector<1x8x512xbf16>
    %226 = vector.shape_cast %225 : vector<1x8x512xbf16> to vector<8x512xbf16>
    %227 = arith.extf %226 : vector<8x512xbf16> to vector<8x512xf32>
    %228 = arith.truncf %223 : vector<8x128xf32> to vector<8x128xbf16>
    %c0_65 = arith.constant 0 : index
    %c0_66 = arith.constant 0 : index
    %229 = vector.load %arg6[%c0_65, %c0_66] : memref<128x512xbf16, #tpu.memory_space<vmem>>, vector<128x512xbf16>
    %cst_67 = arith.constant dense<0.000000e+00> : vector<8x512xf32>
    %230 = tpu.matmul %228, %229, %cst_67 {dimension_numbers = #tpu.dot_dimension_numbers<[1], [0], [0], [1], [0, 0, 1, 1], [], []>} : vector<8x128xbf16>, vector<128x512xbf16>, vector<8x512xf32> -> vector<8x512xf32>
    %231 = arith.addf %227, %230 : vector<8x512xf32>
    %232 = vector.extract_strided_slice %231 {offsets = [0, 0], sizes = [8, 128], strides = [1, 1]} : vector<8x512xf32> to vector<8x128xf32>
    %233 = arith.negf %232 : vector<8x128xf32>
    %234 = math.exp %233 : vector<8x128xf32>
    %cst_68 = arith.constant 1.000000e+00 : f32
    %235 = vector.broadcast %cst_68 : f32 to vector<8x128xf32>
    %236 = arith.addf %235, %234 : vector<8x128xf32>
    %237 = arith.divf %235, %236 : vector<8x128xf32>
    %238 = vector.extract_strided_slice %231 {offsets = [0, 128], sizes = [8, 128], strides = [1, 1]} : vector<8x512xf32> to vector<8x128xf32>
    %239 = arith.negf %238 : vector<8x128xf32>
    %240 = math.exp %239 : vector<8x128xf32>
    %cst_69 = arith.constant 1.000000e+00 : f32
    %241 = vector.broadcast %cst_69 : f32 to vector<8x128xf32>
    %242 = arith.addf %241, %240 : vector<8x128xf32>
    %243 = arith.divf %241, %242 : vector<8x128xf32>
    %244 = vector.extract_strided_slice %231 {offsets = [0, 256], sizes = [8, 128], strides = [1, 1]} : vector<8x512xf32> to vector<8x128xf32>
    %245 = math.tanh %244 : vector<8x128xf32>
    %246 = vector.extract_strided_slice %231 {offsets = [0, 384], sizes = [8, 128], strides = [1, 1]} : vector<8x512xf32> to vector<8x128xf32>
    %247 = arith.negf %246 : vector<8x128xf32>
    %248 = math.exp %247 : vector<8x128xf32>
    %cst_70 = arith.constant 1.000000e+00 : f32
    %249 = vector.broadcast %cst_70 : f32 to vector<8x128xf32>
    %250 = arith.addf %249, %248 : vector<8x128xf32>
    %251 = arith.divf %249, %250 : vector<8x128xf32>
    %252 = arith.mulf %243, %221 : vector<8x128xf32>
    %253 = arith.mulf %237, %245 : vector<8x128xf32>
    %254 = arith.addf %252, %253 : vector<8x128xf32>
    %255 = math.tanh %254 : vector<8x128xf32>
    %256 = arith.mulf %251, %255 : vector<8x128xf32>
    %c7_i32 = arith.constant 7 : i32
    %257 = arith.index_cast %c7_i32 : i32 to index
    %c0_71 = arith.constant 0 : index
    %c0_72 = arith.constant 0 : index
    %258 = vector.load %arg16[%257, %c0_71, %c0_72] : memref<8x8x512xbf16, #tpu.memory_space<vmem>>, vector<1x8x512xbf16>
    %259 = vector.shape_cast %258 : vector<1x8x512xbf16> to vector<8x512xbf16>
    %260 = arith.extf %259 : vector<8x512xbf16> to vector<8x512xf32>
    %261 = arith.truncf %256 : vector<8x128xf32> to vector<8x128xbf16>
    %c0_73 = arith.constant 0 : index
    %c0_74 = arith.constant 0 : index
    %262 = vector.load %arg6[%c0_73, %c0_74] : memref<128x512xbf16, #tpu.memory_space<vmem>>, vector<128x512xbf16>
    %cst_75 = arith.constant dense<0.000000e+00> : vector<8x512xf32>
    %263 = tpu.matmul %261, %262, %cst_75 {dimension_numbers = #tpu.dot_dimension_numbers<[1], [0], [0], [1], [0, 0, 1, 1], [], []>} : vector<8x128xbf16>, vector<128x512xbf16>, vector<8x512xf32> -> vector<8x512xf32>
    %264 = arith.addf %260, %263 : vector<8x512xf32>
    %265 = vector.extract_strided_slice %264 {offsets = [0, 0], sizes = [8, 128], strides = [1, 1]} : vector<8x512xf32> to vector<8x128xf32>
    %266 = arith.negf %265 : vector<8x128xf32>
    %267 = math.exp %266 : vector<8x128xf32>
    %cst_76 = arith.constant 1.000000e+00 : f32
    %268 = vector.broadcast %cst_76 : f32 to vector<8x128xf32>
    %269 = arith.addf %268, %267 : vector<8x128xf32>
    %270 = arith.divf %268, %269 : vector<8x128xf32>
    %271 = vector.extract_strided_slice %264 {offsets = [0, 128], sizes = [8, 128], strides = [1, 1]} : vector<8x512xf32> to vector<8x128xf32>
    %272 = arith.negf %271 : vector<8x128xf32>
    %273 = math.exp %272 : vector<8x128xf32>
    %cst_77 = arith.constant 1.000000e+00 : f32
    %274 = vector.broadcast %cst_77 : f32 to vector<8x128xf32>
    %275 = arith.addf %274, %273 : vector<8x128xf32>
    %276 = arith.divf %274, %275 : vector<8x128xf32>
    %277 = vector.extract_strided_slice %264 {offsets = [0, 256], sizes = [8, 128], strides = [1, 1]} : vector<8x512xf32> to vector<8x128xf32>
    %278 = math.tanh %277 : vector<8x128xf32>
    %279 = vector.extract_strided_slice %264 {offsets = [0, 384], sizes = [8, 128], strides = [1, 1]} : vector<8x512xf32> to vector<8x128xf32>
    %280 = arith.negf %279 : vector<8x128xf32>
    %281 = math.exp %280 : vector<8x128xf32>
    %cst_78 = arith.constant 1.000000e+00 : f32
    %282 = vector.broadcast %cst_78 : f32 to vector<8x128xf32>
    %283 = arith.addf %282, %281 : vector<8x128xf32>
    %284 = arith.divf %282, %283 : vector<8x128xf32>
    %285 = arith.mulf %276, %254 : vector<8x128xf32>
    %286 = arith.mulf %270, %278 : vector<8x128xf32>
    %287 = arith.addf %285, %286 : vector<8x128xf32>
    %288 = math.tanh %287 : vector<8x128xf32>
    %289 = arith.mulf %284, %288 : vector<8x128xf32>
    %c8_i32 = arith.constant 8 : i32
    %290 = arith.truncf %289 : vector<8x128xf32> to vector<8x128xbf16>
    %c0_79 = arith.constant 0 : index
    %c0_80 = arith.constant 0 : index
    %291 = vector.load %arg7[%c0_79, %c0_80] : memref<128x128xbf16, #tpu.memory_space<vmem>>, vector<128x128xbf16>
    %cst_81 = arith.constant dense<0.000000e+00> : vector<8x128xf32>
    %292 = tpu.matmul %290, %291, %cst_81 {dimension_numbers = #tpu.dot_dimension_numbers<[1], [0], [0], [1], [0, 0, 1, 1], [], []>} : vector<8x128xbf16>, vector<128x128xbf16>, vector<8x128xf32> -> vector<8x128xf32>
    %c0_82 = arith.constant 0 : index
    %c0_83 = arith.constant 0 : index
    %293 = vector.load %arg8[%c0_82, %c0_83] : memref<1x128xf32, #tpu.memory_space<vmem>>, vector<1x128xf32>
    %294 = vector.broadcast %293 : vector<1x128xf32> to vector<8x128xf32>
    %295 = arith.addf %292, %294 : vector<8x128xf32>
    %cst_84 = arith.constant 0.000000e+00 : f32
    %296 = vector.broadcast %cst_84 : f32 to vector<8x128xf32>
    %297 = arith.maximumf %295, %296 : vector<8x128xf32>
    %298 = arith.truncf %297 : vector<8x128xf32> to vector<8x128xbf16>
    %c0_85 = arith.constant 0 : index
    %c0_86 = arith.constant 0 : index
    %299 = vector.load %arg9[%c0_85, %c0_86] : memref<128x128xbf16, #tpu.memory_space<vmem>>, vector<128x128xbf16>
    %cst_87 = arith.constant dense<0.000000e+00> : vector<8x128xf32>
    %300 = tpu.matmul %298, %299, %cst_87 {dimension_numbers = #tpu.dot_dimension_numbers<[1], [0], [0], [1], [0, 0, 1, 1], [], []>} : vector<8x128xbf16>, vector<128x128xbf16>, vector<8x128xf32> -> vector<8x128xf32>
    %c0_88 = arith.constant 0 : index
    %c0_89 = arith.constant 0 : index
    %301 = vector.load %arg10[%c0_88, %c0_89] : memref<1x128xf32, #tpu.memory_space<vmem>>, vector<1x128xf32>
    %302 = vector.broadcast %301 : vector<1x128xf32> to vector<8x128xf32>
    %303 = arith.addf %300, %302 : vector<8x128xf32>
    %cst_90 = arith.constant 0.000000e+00 : f32
    %304 = vector.broadcast %cst_90 : f32 to vector<8x128xf32>
    %305 = arith.maximumf %303, %304 : vector<8x128xf32>
    %306 = arith.truncf %305 : vector<8x128xf32> to vector<8x128xbf16>
    %c0_91 = arith.constant 0 : index
    %c0_92 = arith.constant 0 : index
    %307 = vector.load %arg11[%c0_91, %c0_92] : memref<128x128xbf16, #tpu.memory_space<vmem>>, vector<128x128xbf16>
    %cst_93 = arith.constant dense<0.000000e+00> : vector<8x128xf32>
    %308 = tpu.matmul %306, %307, %cst_93 {dimension_numbers = #tpu.dot_dimension_numbers<[1], [0], [0], [1], [0, 0, 1, 1], [], []>} : vector<8x128xbf16>, vector<128x128xbf16>, vector<8x128xf32> -> vector<8x128xf32>
    %c0_94 = arith.constant 0 : index
    %c0_95 = arith.constant 0 : index
    %309 = vector.load %arg12[%c0_94, %c0_95] : memref<1x128xf32, #tpu.memory_space<vmem>>, vector<1x128xf32>
    %310 = vector.broadcast %309 : vector<1x128xf32> to vector<8x128xf32>
    %311 = arith.addf %308, %310 : vector<8x128xf32>
    %cst_96 = arith.constant 0.000000e+00 : f32
    %312 = vector.broadcast %cst_96 : f32 to vector<8x128xf32>
    %313 = arith.maximumf %311, %312 : vector<8x128xf32>
    %314 = arith.truncf %313 : vector<8x128xf32> to vector<8x128xbf16>
    %c0_97 = arith.constant 0 : index
    %c0_98 = arith.constant 0 : index
    %315 = vector.load %arg13[%c0_97, %c0_98] : memref<128x128xbf16, #tpu.memory_space<vmem>>, vector<128x128xbf16>
    %cst_99 = arith.constant dense<0.000000e+00> : vector<8x128xf32>
    %316 = tpu.matmul %314, %315, %cst_99 {dimension_numbers = #tpu.dot_dimension_numbers<[1], [0], [0], [1], [0, 0, 1, 1], [], []>} : vector<8x128xbf16>, vector<128x128xbf16>, vector<8x128xf32> -> vector<8x128xf32>
    %c0_100 = arith.constant 0 : index
    %c0_101 = arith.constant 0 : index
    %317 = vector.load %arg14[%c0_100, %c0_101] : memref<1x128xf32, #tpu.memory_space<vmem>>, vector<1x128xf32>
    %318 = vector.broadcast %317 : vector<1x128xf32> to vector<8x128xf32>
    %319 = arith.addf %316, %318 : vector<8x128xf32>
    %320 = arith.negf %319 : vector<8x128xf32>
    %321 = math.exp %320 : vector<8x128xf32>
    %cst_102 = arith.constant 1.000000e+00 : f32
    %322 = vector.broadcast %cst_102 : f32 to vector<8x128xf32>
    %323 = arith.addf %322, %321 : vector<8x128xf32>
    %324 = arith.divf %322, %323 : vector<8x128xf32>
    %c0_103 = arith.constant 0 : index
    %c0_104 = arith.constant 0 : index
    %325 = vector.load %arg15[%c0_103, %c0_104] : memref<8x128xf32, #tpu.memory_space<vmem>>, vector<8x128xf32>
    tpu.vector_store %arg15[%c0_103, %c0_104], %324 {strides = array<i32>} : memref<8x128xf32, #tpu.memory_space<vmem>>, vector<8x128xf32>,
    return
  }
  func.func @transform_0(%arg0: i32) -> (i32, i32) {
    %c0_i32 = arith.constant 0 : i32
    %c0_i32_0 = arith.constant 0 : i32
    return %arg0, %c0_i32 : i32, i32
  }
  func.func @transform_1(%arg0: i32) -> (i32, i32) {
    %c0_i32 = arith.constant 0 : i32
    %c0_i32_0 = arith.constant 0 : i32
    %c0_i32_1 = arith.constant 0 : i32
    return %c0_i32, %c0_i32_0 : i32, i32
  }
  func.func @transform_2(%arg0: i32) -> (i32, i32) {
    %c0_i32 = arith.constant 0 : i32
    %c0_i32_0 = arith.constant 0 : i32
    %c0_i32_1 = arith.constant 0 : i32
    return %c0_i32, %c0_i32_0 : i32, i32
  }
  func.func @transform_3(%arg0: i32) -> (i32, i32) {
    %c0_i32 = arith.constant 0 : i32
    %c0_i32_0 = arith.constant 0 : i32
    %c0_i32_1 = arith.constant 0 : i32
    return %c0_i32, %c0_i32_0 : i32, i32
  }
  func.func @transform_4(%arg0: i32) -> (i32, i32) {
    %c0_i32 = arith.constant 0 : i32
    %c0_i32_0 = arith.constant 0 : i32
    %c0_i32_1 = arith.constant 0 : i32
    return %c0_i32, %c0_i32_0 : i32, i32
  }
  func.func @transform_5(%arg0: i32) -> (i32, i32) {
    %c0_i32 = arith.constant 0 : i32
    %c0_i32_0 = arith.constant 0 : i32
    %c0_i32_1 = arith.constant 0 : i32
    return %c0_i32, %c0_i32_0 : i32, i32
  }
  func.func @transform_6(%arg0: i32) -> (i32, i32) {
    %c0_i32 = arith.constant 0 : i32
    %c0_i32_0 = arith.constant 0 : i32
    %c0_i32_1 = arith.constant 0 : i32
    return %c0_i32, %c0_i32_0 : i32, i32
  }
  func.func @transform_7(%arg0: i32) -> (i32, i32) {
    %c0_i32 = arith.constant 0 : i32
    %c0_i32_0 = arith.constant 0 : i32
    %c0_i32_1 = arith.constant 0 : i32
    return %c0_i32, %c0_i32_0 : i32, i32
  }
  func.func @transform_8(%arg0: i32) -> (i32, i32) {
    %c0_i32 = arith.constant 0 : i32
    %c0_i32_0 = arith.constant 0 : i32
    %c0_i32_1 = arith.constant 0 : i32
    return %c0_i32, %c0_i32_0 : i32, i32
  }
  func.func @transform_9(%arg0: i32) -> (i32, i32) {
    %c0_i32 = arith.constant 0 : i32
    %c0_i32_0 = arith.constant 0 : i32
    %c0_i32_1 = arith.constant 0 : i32
    return %c0_i32, %c0_i32_0 : i32, i32
  }
  func.func @transform_10(%arg0: i32) -> (i32, i32) {
    %c0_i32 = arith.constant 0 : i32
    %c0_i32_0 = arith.constant 0 : i32
    %c0_i32_1 = arith.constant 0 : i32
    return %c0_i32, %c0_i32_0 : i32, i32
  }
  func.func @transform_11(%arg0: i32) -> (i32, i32) {
    %c0_i32 = arith.constant 0 : i32
    %c0_i32_0 = arith.constant 0 : i32
    %c0_i32_1 = arith.constant 0 : i32
    return %c0_i32, %c0_i32_0 : i32, i32
  }
  func.func @transform_12(%arg0: i32) -> (i32, i32) {
    %c0_i32 = arith.constant 0 : i32
    %c0_i32_0 = arith.constant 0 : i32
    %c0_i32_1 = arith.constant 0 : i32
    return %c0_i32, %c0_i32_0 : i32, i32
  }
  func.func @transform_13(%arg0: i32) -> (i32, i32) {
    %c0_i32 = arith.constant 0 : i32
    %c0_i32_0 = arith.constant 0 : i32
    %c0_i32_1 = arith.constant 0 : i32
    return %c0_i32, %c0_i32_0 : i32, i32
  }
  func.func @transform_14(%arg0: i32) -> (i32, i32) {
    %c0_i32 = arith.constant 0 : i32
    %c0_i32_0 = arith.constant 0 : i32
    return %arg0, %c0_i32 : i32, i32
  }
}

</mosaic_0001>

<llo_original>
// kernel: tpu_custom_call.1
$region0: #{tpu_custom_call.1}
  #allocation0 [shape = 'u32[]', space=smem, size = 0x4, offset = 0x4, fixed_abs, tag = 'smem constant byte address 0x4 - core index']
  #allocation1 [shape = 'u32[144,128]{1,0:T(1,128)}', space=vmem, size = 0x12000, scoped, tag = 'internal scratch']
  #allocation2 [shape = 'bf16[8,8,512]{2,1,0:T(8,128)(2,1)}', space=vmem, size = 0x10000, scoped, tag = 'scratch operand']
  %s0 = inlined_call_operand.hbm [shape: s32[8,8], index: 0, kind: input, shape index: {}]
  %s1 = inlined_call_operand.vmem [shape: bf16[64,32], index: 1, kind: input, shape index: {}]
  %s2 = inlined_call_operand.vmem [shape: f32[1,32], index: 2, kind: input, shape index: {}]
  %s3 = inlined_call_operand.hbm [shape: bf16[32,512], index: 3, kind: input, shape index: {}]
  %s4 = inlined_call_operand.hbm [shape: f32[1,512], index: 4, kind: input, shape index: {}]
  %s5 = inlined_call_operand.hbm [shape: bf16[128,512], index: 5, kind: input, shape index: {}]
  %s6 = inlined_call_operand.hbm [shape: bf16[128,128], index: 6, kind: input, shape index: {}]
  %s7 = inlined_call_operand.vmem [shape: f32[1,128], index: 7, kind: input, shape index: {}]
  %s8 = inlined_call_operand.hbm [shape: bf16[128,128], index: 8, kind: input, shape index: {}]
  %s9 = inlined_call_operand.hbm [shape: f32[1,128], index: 9, kind: input, shape index: {}]
  %s10 = inlined_call_operand.vmem [shape: bf16[128,128], index: 10, kind: input, shape index: {}]
  %s11 = inlined_call_operand.vmem [shape: f32[1,128], index: 11, kind: input, shape index: {}]
  %s12 = inlined_call_operand.hbm [shape: bf16[128,128], index: 12, kind: input, shape index: {}]
  %s13 = inlined_call_operand.vmem [shape: f32[1,128], index: 13, kind: input, shape index: {}]
  %s14 = inlined_call_operand.hbm [shape: f32[8,128], index: 14, kind: output, shape index: {}]
  %s15 = sld [smem:[#allocation0]]
  $region98: #{tpu_custom_call.1} parent=0
    _
  %s17 = ssub.s32 1, %s15
  %s18 = scalar_select 0, %s17, %s15
  $region1: #{tpu_custom_call.1} parent=0
    #allocation3 [shape = 'u8[4096]{0}', space=vmem, size = 0x1000, scoped, tag = 'input window, operand 0, single buffered']
    #allocation4 [shape = 's32[1]{0}', space=sflag, size = 0x4, scoped, tag = 'scoped memory for tpu_custom_call.1']
    #allocation5 [shape = 's32[1]{0}', space=sflag, size = 0x4, scoped, tag = 'scoped memory for tpu_custom_call.1']
    #allocation6 [shape = 'u8[32768]{0}', space=vmem, size = 0x8000, scoped, tag = 'input window, operand 3, single buffered']
    #allocation7 [shape = 's32[1]{0}', space=sflag, size = 0x4, scoped, tag = 'scoped memory for tpu_custom_call.1']
    #allocation8 [shape = 'u8[2048]{0}', space=vmem, size = 0x800, scoped, tag = 'input window, operand 4, single buffered']
    #allocation9 [shape = 'u8[131072]{0}', space=vmem, size = 0x20000, scoped, tag = 'input window, operand 5, single buffered']
    #allocation10 [shape = 's32[1]{0}', space=sflag, size = 0x4, scoped, tag = 'scoped memory for tpu_custom_call.1']
    #allocation11 [shape = 'u8[32768]{0}', space=vmem, size = 0x8000, scoped, tag = 'input window, operand 6, single buffered']
    #allocation12 [shape = 'u8[32768]{0}', space=vmem, size = 0x8000, scoped, tag = 'input window, operand 8, single buffered']
    #allocation13 [shape = 's32[1]{0}', space=sflag, size = 0x4, scoped, tag = 'scoped memory for tpu_custom_call.1']
    #allocation14 [shape = 'u8[512]{0}', space=vmem, size = 0x400, scoped, tag = 'input window, operand 9, single buffered']
    #allocation15 [shape = 'u8[32768]{0}', space=vmem, size = 0x8000, scoped, tag = 'input window, operand 12, single buffered']
    #allocation16 [shape = 's32[1]{0}', space=sflag, size = 0x4, scoped, tag = 'scoped memory for tpu_custom_call.1']
    #allocation17 [shape = 'u8[4096]{0}', space=vmem, size = 0x1000, scoped, tag = 'output window, operand 0, single buffered']
    %19 = vsyncpa [#allocation4], 0
    %20 = vsyncpa [#allocation7], 0
    %21 = vsyncpa [#allocation10], 0
    %22 = vsyncpa [#allocation13], 0
    %23 = vsyncpa [#allocation16], 0
    %24 = vsyncpa [#allocation5], 0
    // Predicated region
    $region2: #{tpu_custom_call.1} parent=1 // pred_check
      _
    $region3: #{tpu_custom_call.1} parent=1 // pred_check_branch
      %26 = sbr.rel (0) target = $region5
    $region4: #{tpu_custom_call.1} parent=1 // pred_region
      %s28 = ssub.s32 128, 128
      %29 = vsyncadd [#allocation4], %s28
      %s31 = sshll.u32 [#allocation3], 4
      %s32 = int_to_ptr.vmem [resolvable:$true] %s31
      %34 = dma.hbm_to_vmem [thread:$0]  %s0, 128, %s32, [#allocation4]
    $region5: #{tpu_custom_call.1} parent=1 // pred_fallthru
      _
    // Predicated region
    $region6: #{tpu_custom_call.1} parent=1 // pred_check
      _
    $region7: #{tpu_custom_call.1} parent=1 // pred_check_branch
      %36 = sbr.rel (0) target = $region9
    $region8: #{tpu_custom_call.1} parent=1 // pred_region
      _
    $region9: #{tpu_custom_call.1} parent=1 // pred_fallthru
      _
    // Predicated region
    $region10: #{tpu_custom_call.1} parent=1 // pred_check
      _
    $region11: #{tpu_custom_call.1} parent=1 // pred_check_branch
      %38 = sbr.rel (0) target = $region13
    $region12: #{tpu_custom_call.1} parent=1 // pred_region
      _
    $region13: #{tpu_custom_call.1} parent=1 // pred_fallthru
      _
    // Predicated region
    $region14: #{tpu_custom_call.1} parent=1 // pred_check
      _
    $region15: #{tpu_custom_call.1} parent=1 // pred_check_branch
      %40 = sbr.rel (0) target = $region17
    $region16: #{tpu_custom_call.1} parent=1 // pred_region
      %s42 = ssub.s32 1024, 1024
      %43 = vsyncadd [#allocation7], %s42
      %s44 = sshll.u32 [#allocation6], 4
      %s45 = int_to_ptr.vmem [resolvable:$true] %s44
      %50 = dma.hbm_to_vmem [thread:$0]  %s3, 1024, %s45, [#allocation7], 256, 256, 16
    $region17: #{tpu_custom_call.1} parent=1 // pred_fallthru
      _
    // Predicated region
    $region18: #{tpu_custom_call.1} parent=1 // pred_check
      _
    $region19: #{tpu_custom_call.1} parent=1 // pred_check_branch
      %52 = sbr.rel (0) target = $region21
    $region20: #{tpu_custom_call.1} parent=1 // pred_region
      %s54 = ssub.s32 64, 64
      %55 = vsyncadd [#allocation7], %s54
      %s57 = sshll.u32 [#allocation8], 4
      %s58 = int_to_ptr.vmem [resolvable:$true] %s57
      %60 = dma.hbm_to_vmem [thread:$0]  %s4, 64, %s58, [#allocation7]
    $region21: #{tpu_custom_call.1} parent=1 // pred_fallthru
      _
    // Predicated region
    $region22: #{tpu_custom_call.1} parent=1 // pred_check
      _
    $region23: #{tpu_custom_call.1} parent=1 // pred_check_branch
      %62 = sbr.rel (0) target = $region25
    $region24: #{tpu_custom_call.1} parent=1 // pred_region
      %s64 = ssub.s32 4096, 4096
      %65 = vsyncadd [#allocation10], %s64
      %s66 = sshll.u32 [#allocation9], 4
      %s67 = int_to_ptr.vmem [resolvable:$true] %s66
      %72 = dma.hbm_to_vmem [thread:$0]  %s5, 4096, %s67, [#allocation10], 256, 256, 16
    $region25: #{tpu_custom_call.1} parent=1 // pred_fallthru
      _
    // Predicated region
    $region26: #{tpu_custom_call.1} parent=1 // pred_check
      _
    $region27: #{tpu_custom_call.1} parent=1 // pred_check_branch
      %74 = sbr.rel (0) target = $region29
    $region28: #{tpu_custom_call.1} parent=1 // pred_region
      %s76 = ssub.s32 1024, 1024
      %77 = vsyncadd [#allocation10], %s76
      %s78 = sshll.u32 [#allocation11], 4
      %s79 = int_to_ptr.vmem [resolvable:$true] %s78
      %84 = dma.hbm_to_vmem [thread:$0]  %s6, 1024, %s79, [#allocation10], 64, 64, 4
    $region29: #{tpu_custom_call.1} parent=1 // pred_fallthru
      _
    // Predicated region
    $region30: #{tpu_custom_call.1} parent=1 // pred_check
      _
    $region31: #{tpu_custom_call.1} parent=1 // pred_check_branch
      %86 = sbr.rel (0) target = $region33
    $region32: #{tpu_custom_call.1} parent=1 // pred_region
      _
    $region33: #{tpu_custom_call.1} parent=1 // pred_fallthru
      _
    // Predicated region
    $region34: #{tpu_custom_call.1} parent=1 // pred_check
      _
    $region35: #{tpu_custom_call.1} parent=1 // pred_check_branch
      %88 = sbr.rel (0) target = $region37
    $region36: #{tpu_custom_call.1} parent=1 // pred_region
      %s90 = ssub.s32 1024, 1024
      %91 = vsyncadd [#allocation13], %s90
      %s92 = sshll.u32 [#allocation12], 4
      %s93 = int_to_ptr.vmem [resolvable:$true] %s92
      %98 = dma.hbm_to_vmem [thread:$0]  %s8, 1024, %s93, [#allocation13], 64, 64, 4
    $region37: #{tpu_custom_call.1} parent=1 // pred_fallthru
      _
    // Predicated region
    $region38: #{tpu_custom_call.1} parent=1 // pred_check
      _
    $region39: #{tpu_custom_call.1} parent=1 // pred_check_branch
      %100 = sbr.rel (0) target = $region41
    $region40: #{tpu_custom_call.1} parent=1 // pred_region
      %s102 = ssub.s32 16, 16
      %103 = vsyncadd [#allocation13], %s102
      %s105 = sshll.u32 [#allocation14], 4
      %s106 = int_to_ptr.vmem [resolvable:$true] %s105
      %108 = dma.hbm_to_vmem [thread:$0]  %s9, 16, %s106, [#allocation13]
    $region41: #{tpu_custom_call.1} parent=1 // pred_fallthru
      _
    // Predicated region
    $region42: #{tpu_custom_call.1} parent=1 // pred_check
      _
    $region43: #{tpu_custom_call.1} parent=1 // pred_check_branch
      %110 = sbr.rel (0) target = $region45
    $region44: #{tpu_custom_call.1} parent=1 // pred_region
      _
    $region45: #{tpu_custom_call.1} parent=1 // pred_fallthru
      _
    // Predicated region
    $region46: #{tpu_custom_call.1} parent=1 // pred_check
      _
    $region47: #{tpu_custom_call.1} parent=1 // pred_check_branch
      %112 = sbr.rel (0) target = $region49
    $region48: #{tpu_custom_call.1} parent=1 // pred_region
      _
    $region49: #{tpu_custom_call.1} parent=1 // pred_fallthru
      _
    // Predicated region
    $region50: #{tpu_custom_call.1} parent=1 // pred_check
      _
    $region51: #{tpu_custom_call.1} parent=1 // pred_check_branch
      %114 = sbr.rel (0) target = $region53
    $region52: #{tpu_custom_call.1} parent=1 // pred_region
      %s116 = ssub.s32 1024, 1024
      %117 = vsyncadd [#allocation16], %s116
      %s118 = sshll.u32 [#allocation15], 4
      %s119 = int_to_ptr.vmem [resolvable:$true] %s118
      %124 = dma.hbm_to_vmem [thread:$0]  %s12, 1024, %s119, [#allocation16], 64, 64, 4
    $region53: #{tpu_custom_call.1} parent=1 // pred_fallthru
      _
    // Predicated region
    $region54: #{tpu_custom_call.1} parent=1 // pred_check
      _
    $region55: #{tpu_custom_call.1} parent=1 // pred_check_branch
      %126 = sbr.rel (0) target = $region57
    $region56: #{tpu_custom_call.1} parent=1 // pred_region
      _
    $region57: #{tpu_custom_call.1} parent=1 // pred_fallthru
      _
    // Predicated region
    $region58: #{tpu_custom_call.1} parent=1 // pred_check
      _
    $region59: #{tpu_custom_call.1} parent=1 // pred_check_branch
      %128 = sbr.rel (0) target = $region61
    $region60: #{tpu_custom_call.1} parent=1 // pred_region
      %129 = dma.done [#allocation4], 128
    $region61: #{tpu_custom_call.1} parent=1 // pred_fallthru
      _
    // Predicated region
    $region62: #{tpu_custom_call.1} parent=1 // pred_check
      _
    $region63: #{tpu_custom_call.1} parent=1 // pred_check_branch
      %131 = sbr.rel (0) target = $region65
    $region64: #{tpu_custom_call.1} parent=1 // pred_region
      %132 = dma.done [#allocation7], 1024
    $region65: #{tpu_custom_call.1} parent=1 // pred_fallthru
      _
    // Predicated region
    $region66: #{tpu_custom_call.1} parent=1 // pred_check
      _
    $region67: #{tpu_custom_call.1} parent=1 // pred_check_branch
      %134 = sbr.rel (0) target = $region69
    $region68: #{tpu_custom_call.1} parent=1 // pred_region
      %135 = dma.done [#allocation7], 64
    $region69: #{tpu_custom_call.1} parent=1 // pred_fallthru
      _
    // Predicated region
    $region70: #{tpu_custom_call.1} parent=1 // pred_check
      _
    $region71: #{tpu_custom_call.1} parent=1 // pred_check_branch
      %137 = sbr.rel (0) target = $region73
    $region72: #{tpu_custom_call.1} parent=1 // pred_region
      %138 = dma.done [#allocation10], 4096
    $region73: #{tpu_custom_call.1} parent=1 // pred_fallthru
      _
    // Predicated region
    $region74: #{tpu_custom_call.1} parent=1 // pred_check
      _
    $region75: #{tpu_custom_call.1} parent=1 // pred_check_branch
      %140 = sbr.rel (0) target = $region77
    $region76: #{tpu_custom_call.1} parent=1 // pred_region
      %141 = dma.done [#allocation10], 1024
    $region77: #{tpu_custom_call.1} parent=1 // pred_fallthru
      _
    // Predicated region
    $region78: #{tpu_custom_call.1} parent=1 // pred_check
      _
    $region79: #{tpu_custom_call.1} parent=1 // pred_check_branch
      %143 = sbr.rel (0) target = $region81
    $region80: #{tpu_custom_call.1} parent=1 // pred_region
      %144 = dma.done [#allocation13], 1024
    $region81: #{tpu_custom_call.1} parent=1 // pred_fallthru
      _
    // Predicated region
    $region82: #{tpu_custom_call.1} parent=1 // pred_check
      _
    $region83: #{tpu_custom_call.1} parent=1 // pred_check_branch
      %146 = sbr.rel (0) target = $region85
    $region84: #{tpu_custom_call.1} parent=1 // pred_region
      %147 = dma.done [#allocation13], 16
    $region85: #{tpu_custom_call.1} parent=1 // pred_fallthru
      _
    // Predicated region
    $region86: #{tpu_custom_call.1} parent=1 // pred_check
      _
    $region87: #{tpu_custom_call.1} parent=1 // pred_check_branch
      %149 = sbr.rel (0) target = $region89
    $region88: #{tpu_custom_call.1} parent=1 // pred_region
      %150 = dma.done [#allocation16], 1024
    $region89: #{tpu_custom_call.1} parent=1 // pred_fallthru
      _
    %v152 = vld [vmem:[#allocation3] sm:$0xff]
    %v153 = vlaneseq
    %v154 = vshrl.u32 %v153, 7
    %v155 = vsub.s32 0, %v154
    %v156 = vrot.slane %v152, %v155
    %158 = vbcast.lane.b32.xlu0 %v156, 256
    %v159 = vpop.permute.xlu0 %158
    %v160 = vlaneseq
    %v161 = vshrl.u32 %v160, 7
    %v162 = vsub.s32 1, %v161
    %v163 = vrot.slane %v152, %v162
    %165 = vbcast.lane.b32.xlu0 %v163, 256
    %v166 = vpop.permute.xlu0 %165
    %v167 = vlaneseq
    %v168 = vshrl.u32 %v167, 7
    %v169 = vsub.s32 2, %v168
    %v170 = vrot.slane %v152, %v169
    %172 = vbcast.lane.b32.xlu0 %v170, 256
    %v173 = vpop.permute.xlu0 %172
    %v174 = vlaneseq
    %v175 = vshrl.u32 %v174, 7
    %v176 = vsub.s32 3, %v175
    %v177 = vrot.slane %v152, %v176
    %179 = vbcast.lane.b32.xlu0 %v177, 256
    %v180 = vpop.permute.xlu0 %179
    %v181 = vlaneseq
    %v182 = vshrl.u32 %v181, 7
    %v183 = vsub.s32 4, %v182
    %v184 = vrot.slane %v152, %v183
    %186 = vbcast.lane.b32.xlu0 %v184, 256
    %v187 = vpop.permute.xlu0 %186
    %v188 = vlaneseq
    %v189 = vshrl.u32 %v188, 7
    %v190 = vsub.s32 5, %v189
    %v191 = vrot.slane %v152, %v190
    %193 = vbcast.lane.b32.xlu0 %v191, 256
    %v194 = vpop.permute.xlu0 %193
    %v195 = vlaneseq
    %v196 = vshrl.u32 %v195, 7
    %v197 = vsub.s32 6, %v196
    %v198 = vrot.slane %v152, %v197
    %200 = vbcast.lane.b32.xlu0 %v198, 256
    %v201 = vpop.permute.xlu0 %200
    %v202 = vlaneseq
    %v203 = vshrl.u32 %v202, 7
    %v204 = vsub.s32 7, %v203
    %v205 = vrot.slane %v152, %v204
    %207 = vbcast.lane.b32.xlu0 %v205, 256
    %v208 = vpop.permute.xlu0 %207
    %v209 = vlaneseq
    %v210 = vand.u32 %v209, 127
    %vm211 = vcmp.eq.s32.totalorder %v159, %v210
    %vm212 = vcmp.eq.s32.totalorder %v166, %v210
    %vm213 = vcmp.eq.s32.totalorder %v173, %v210
    %vm214 = vcmp.eq.s32.totalorder %v180, %v210
    %vm215 = vcmp.eq.s32.totalorder %v187, %v210
    %vm216 = vcmp.eq.s32.totalorder %v194, %v210
    %vm217 = vcmp.eq.s32.totalorder %v201, %v210
    %vm218 = vcmp.eq.s32.totalorder %v208, %v210
    %v219 = vsel %vm211, 1, 0
    %v220 = vsel %vm212, 1, 0
    %v221 = vsel %vm213, 1, 0
    %v222 = vsel %vm214, 1, 0
    %v223 = vsel %vm215, 1, 0
    %v224 = vsel %vm216, 1, 0
    %v225 = vsel %vm217, 1, 0
    %v226 = vsel %vm218, 1, 0
    %v227 = vcvt.s32.f32 %v219
    %v228 = vcvt.s32.f32 %v220
    %v229 = vcvt.s32.f32 %v221
    %v230 = vcvt.s32.f32 %v222
    %v231 = vcvt.s32.f32 %v223
    %v232 = vcvt.s32.f32 %v224
    %v233 = vcvt.s32.f32 %v225
    %v234 = vcvt.s32.f32 %v226
    %v235 = vpack.c.bf16 %v227, %v227
    %v236 = vpack.c.bf16 %v228, %v228
    %v237 = vpack.c.bf16 %v229, %v229
    %v238 = vpack.c.bf16 %v230, %v230
    %v239 = vpack.c.bf16 %v231, %v231
    %v240 = vpack.c.bf16 %v232, %v232
    %v241 = vpack.c.bf16 %v233, %v233
    %v242 = vpack.c.bf16 %v234, %v234
    %v243 = vld [vmem:[%s1] sm:$0xf]
    %v244 = vld [vmem:[%s1 + $0x4] sm:$0xf]
    %v245 = vld [vmem:[%s1 + $0x8] sm:$0xf]
    %v246 = vld [vmem:[%s1 + $0xc] sm:$0xf]
    %v247 = vld [vmem:[%s1 + $0x10] sm:$0xf]
    %v248 = vld [vmem:[%s1 + $0x14] sm:$0xf]
    %v249 = vld [vmem:[%s1 + $0x18] sm:$0xf]
    %v250 = vld [vmem:[%s1 + $0x1c] sm:$0xf]
    %v251 = vld [vmem:[%s2] sm:$0x1]
    %v253 = vlaneseq
    %v254 = vshrl.u32 %v253, 7
    %v255 = vsub.s32 0, %v254
    %v256 = vrot.slane %v251, %v255
    %v266 = vunpack.c.l.b16 %v235
    %v267 = vunpack.c.l.b16 %v236
    %v268 = vunpack.c.l.b16 %v237
    %v269 = vunpack.c.l.b16 %v238
    %v270 = vunpack.c.l.b16 %v239
    %v271 = vunpack.c.l.b16 %v240
    %v272 = vunpack.c.l.b16 %v241
    %v273 = vunpack.c.l.b16 %v242
    %v274 = vpack.c.b16 %v267, %v266
    %v275 = vpack.c.b16 %v269, %v268
    %v276 = vpack.c.b16 %v271, %v270
    %v277 = vpack.c.b16 %v273, %v272
    %v286 = vunpack.c.l.b16 %v243
    %v287 = vunpack.c.l.b16 %v244
    %v288 = vunpack.c.l.b16 %v245
    %v289 = vunpack.c.l.b16 %v246
    %v290 = vunpack.c.l.b16 %v247
    %v291 = vunpack.c.l.b16 %v248
    %v292 = vunpack.c.l.b16 %v249
    %v293 = vunpack.c.l.b16 %v250
    %v294 = vpack.c.b16 %v287, %v286
    %v295 = vpack.c.b16 %v289, %v288
    %v296 = vpack.c.b16 %v291, %v290
    %v297 = vpack.c.b16 %v293, %v292
    %vm302 = vcmask 523264
    %v304 = vsel %vm302, %v274, 0
    %v307 = vsel %vm302, %v275, 0
    %v310 = vsel %vm302, %v276, 0
    %v313 = vsel %vm302, %v277, 0
    %315 = vmatprep.subr.bf16.mxu0 0
    %316 = vmatpush1.bf16.msra.mxu0 0
    %317 = vmatprep.subr.bf16.mxu0 0
    %318 = vmatpush1.bf16.msra.mxu0 0
    %319 = vmatprep.subr.bf16.mxu0 0
    %320 = vmatpush1.bf16.msra.mxu0 0
    %321 = vmatprep.subr.bf16.mxu0 0
    %322 = vmatpush1.bf16.msra.mxu0 0
    %323 = vmatprep.subr.bf16.mxu0 0
    %324 = vmatpush1.bf16.msra.mxu0 %v297
    %325 = vmatprep.subr.bf16.mxu0 0
    %326 = vmatpush1.bf16.msra.mxu0 %v296
    %327 = vmatprep.subr.bf16.mxu0 0
    %328 = vmatpush1.bf16.msra.mxu0 %v295
    %329 = vmatprep.subr.bf16.mxu0 0
    %330 = vmatpush1.bf16.msra.mxu0 %v294
    %331 = vmatprep.subr.bf16.mxu0 0
    %332 = vmatpush2.bf16.msra.mxu0 0
    %333 = vmatprep.subr.bf16.mxu0 0
    %334 = vmatpush2.bf16.msra.mxu0 0
    %335 = vmatprep.subr.bf16.mxu0 0
    %336 = vmatpush2.bf16.msra.mxu0 0
    %337 = vmatprep.subr.bf16.mxu0 0
    %338 = vmatpush2.bf16.msra.mxu0 0
    %339 = vmatprep.subr.bf16.mxu0 0
    %340 = vmatpush2.bf16.msra.mxu0 0
    %341 = vmatprep.subr.bf16.mxu0 0
    %342 = vmatpush2.bf16.msra.mxu0 0
    %343 = vmatprep.subr.bf16.mxu0 0
    %344 = vmatpush2.bf16.msra.mxu0 0
    %345 = vmatprep.subr.bf16.mxu0 0
    %346 = vmatpush2.bf16.msra.mxu0 0
    %347 = vmatprep.mubr.bf16.mxu0 0
    %348 = vmatmul.mubr.bf16.gmra.mxu0 %v304
    %v349 = vpop.f32.mrf.mxu0
    %v350 = vadd.f32 %v256, %v349
    %v351 = vpop.f32.mrf.mxu0
    %v352 = vpop.f32.mrf.mxu0
    %v353 = vadd.f32 %v256, %v352
    %v354 = vpop.f32.mrf.mxu0
    %355 = vmatprep.mubr.bf16.mxu0 0
    %356 = vmatmul.mubr.bf16.gmra.mxu0 %v307
    %v357 = vpop.f32.mrf.mxu0
    %v358 = vadd.f32 %v256, %v357
    %v359 = vpop.f32.mrf.mxu0
    %v360 = vpop.f32.mrf.mxu0
    %v361 = vadd.f32 %v256, %v360
    %v362 = vpop.f32.mrf.mxu0
    %363 = vmatprep.mubr.bf16.mxu0 0
    %364 = vmatmul.mubr.bf16.gmra.mxu0 %v310
    %v365 = vpop.f32.mrf.mxu0
    %v366 = vadd.f32 %v256, %v365
    %v367 = vpop.f32.mrf.mxu0
    %v368 = vpop.f32.mrf.mxu0
    %v369 = vadd.f32 %v256, %v368
    %v370 = vpop.f32.mrf.mxu0
    %371 = vmatprep.mubr.bf16.mxu0 0
    %372 = vmatmul.mubr.bf16.gmra.mxu0 %v313
    %v373 = vpop.f32.mrf.mxu0
    %v374 = vadd.f32 %v256, %v373
    %v375 = vpop.f32.mrf.mxu0
    %v376 = vpop.f32.mrf.mxu0
    %v377 = vadd.f32 %v256, %v376
    %v378 = vpop.f32.mrf.mxu0
    %379 = vdwg.mxu0
    %v380 = vmax.f32 %v350, 0.0
    %v381 = vmax.f32 %v353, 0.0
    %v382 = vmax.f32 %v358, 0.0
    %v383 = vmax.f32 %v361, 0.0
    %v384 = vmax.f32 %v366, 0.0
    %v385 = vmax.f32 %v369, 0.0
    %v386 = vmax.f32 %v374, 0.0
    %v387 = vmax.f32 %v377, 0.0
    %v388 = vpack.c.bf16 %v381, %v380
    %v389 = vpack.c.bf16 %v383, %v382
    %v390 = vpack.c.bf16 %v385, %v384
    %v391 = vpack.c.bf16 %v387, %v386
    %v392 = vld [vmem:[#allocation6] sm:$0xff]
    %v393 = vld [vmem:[#allocation6 + $0x8] sm:$0xff]
    %v394 = vld [vmem:[#allocation6 + $0x10] sm:$0xff]
    %v395 = vld [vmem:[#allocation6 + $0x18] sm:$0xff]
    %v396 = vld [vmem:[#allocation6 + $0x20] sm:$0xff]
    %v397 = vld [vmem:[#allocation6 + $0x28] sm:$0xff]
    %v398 = vld [vmem:[#allocation6 + $0x30] sm:$0xff]
    %v399 = vld [vmem:[#allocation6 + $0x38] sm:$0xff]
    %v400 = vld [vmem:[#allocation8] sm:$0xf]
    %v402 = vlaneseq
    %v403 = vshrl.u32 %v402, 7
    %v404 = vsub.s32 0, %v403
    %v405 = vrot.slane %v400, %v404
    %v406 = vlaneseq
    %v407 = vshrl.u32 %v406, 7
    %v408 = vsub.s32 1, %v407
    %v409 = vrot.slane %v400, %v408
    %v410 = vlaneseq
    %v411 = vshrl.u32 %v410, 7
    %v412 = vsub.s32 2, %v411
    %v413 = vrot.slane %v400, %v412
    %v414 = vlaneseq
    %v415 = vshrl.u32 %v414, 7
    %v416 = vsub.s32 3, %v415
    %v417 = vrot.slane %v400, %v416
    %v430 = vunpack.c.l.b16 %v392
    %v431 = vunpack.c.h.b16 %v392
    %v432 = vunpack.c.l.b16 %v393
    %v433 = vunpack.c.h.b16 %v393
    %v434 = vunpack.c.l.b16 %v394
    %v435 = vunpack.c.h.b16 %v394
    %v436 = vunpack.c.l.b16 %v395
    %v437 = vunpack.c.h.b16 %v395
    %v438 = vunpack.c.l.b16 %v396
    %v439 = vunpack.c.h.b16 %v396
    %v440 = vunpack.c.l.b16 %v397
    %v441 = vunpack.c.h.b16 %v397
    %v442 = vunpack.c.l.b16 %v398
    %v443 = vunpack.c.h.b16 %v398
    %v444 = vunpack.c.l.b16 %v399
    %v445 = vunpack.c.h.b16 %v399
    %v446 = vpack.c.b16 %v434, %v430
    %v447 = vpack.c.b16 %v435, %v431
    %v448 = vpack.c.b16 %v436, %v432
    %v449 = vpack.c.b16 %v437, %v433
    %v450 = vpack.c.b16 %v442, %v438
    %v451 = vpack.c.b16 %v443, %v439
    %v452 = vpack.c.b16 %v444, %v440
    %v453 = vpack.c.b16 %v445, %v441
    %vm462 = vcmask 261120
    %v464 = vsel %vm462, %v388, 0
    %v467 = vsel %vm462, %v389, 0
    %v470 = vsel %vm462, %v390, 0
    %v473 = vsel %vm462, %v391, 0
    %475 = vmatprep.subr.bf16.mxu0 0
    %476 = vmatpush1.bf16.msra.mxu0 0
    %477 = vmatprep.subr.bf16.mxu0 0
    %478 = vmatpush1.bf16.msra.mxu0 0
    %479 = vmatprep.subr.bf16.mxu0 0
    %480 = vmatpush1.bf16.msra.mxu0 0
    %481 = vmatprep.subr.bf16.mxu0 0
    %482 = vmatpush1.bf16.msra.mxu0 0
    %483 = vmatprep.subr.bf16.mxu0 0
    %484 = vmatpush1.bf16.msra.mxu0 0
    %485 = vmatprep.subr.bf16.mxu0 0
    %486 = vmatpush1.bf16.msra.mxu0 0
    %487 = vmatprep.subr.bf16.mxu0 %v451
    %488 = vmatpush1.bf16.msra.mxu0 %v450
    %489 = vmatprep.subr.bf16.mxu0 %v447
    %490 = vmatpush1.bf16.msra.mxu0 %v446
    %491 = vmatprep.subr.bf16.mxu0 0
    %492 = vmatpush2.bf16.msra.mxu0 0
    %493 = vmatprep.subr.bf16.mxu0 0
    %494 = vmatpush2.bf16.msra.mxu0 0
    %495 = vmatprep.subr.bf16.mxu0 0
    %496 = vmatpush2.bf16.msra.mxu0 0
    %497 = vmatprep.subr.bf16.mxu0 0
    %498 = vmatpush2.bf16.msra.mxu0 0
    %499 = vmatprep.subr.bf16.mxu0 0
    %500 = vmatpush2.bf16.msra.mxu0 0
    %501 = vmatprep.subr.bf16.mxu0 0
    %502 = vmatpush2.bf16.msra.mxu0 0
    %503 = vmatprep.subr.bf16.mxu0 0
    %504 = vmatpush2.bf16.msra.mxu0 0
    %505 = vmatprep.subr.bf16.mxu0 0
    %506 = vmatpush2.bf16.msra.mxu0 0
    %507 = vmatprep.mubr.bf16.mxu0 0
    %508 = vmatmul.mubr.bf16.gmra.mxu0 %v464
    %v509 = vpop.f32.mrf.mxu0
    %v510 = vadd.f32 %v405, %v509
    %v511 = vpop.f32.mrf.mxu0
    %v512 = vadd.f32 %v409, %v511
    %v513 = vpop.f32.mrf.mxu0
    %v514 = vadd.f32 %v405, %v513
    %v515 = vpop.f32.mrf.mxu0
    %v516 = vadd.f32 %v409, %v515
    %517 = vmatprep.mubr.bf16.mxu0 0
    %518 = vmatmul.mubr.bf16.gmra.mxu0 %v467
    %v519 = vpop.f32.mrf.mxu0
    %v520 = vadd.f32 %v405, %v519
    %v521 = vpop.f32.mrf.mxu0
    %v522 = vadd.f32 %v409, %v521
    %v523 = vpop.f32.mrf.mxu0
    %v524 = vadd.f32 %v405, %v523
    %v525 = vpop.f32.mrf.mxu0
    %v526 = vadd.f32 %v409, %v525
    %527 = vmatprep.mubr.bf16.mxu0 0
    %528 = vmatmul.mubr.bf16.gmra.mxu0 %v470
    %v529 = vpop.f32.mrf.mxu0
    %v530 = vadd.f32 %v405, %v529
    %v531 = vpop.f32.mrf.mxu0
    %v532 = vadd.f32 %v409, %v531
    %v533 = vpop.f32.mrf.mxu0
    %v534 = vadd.f32 %v405, %v533
    %v535 = vpop.f32.mrf.mxu0
    %v536 = vadd.f32 %v409, %v535
    %537 = vmatprep.mubr.bf16.mxu0 0
    %538 = vmatmul.mubr.bf16.gmra.mxu0 %v473
    %v539 = vpop.f32.mrf.mxu0
    %v540 = vadd.f32 %v405, %v539
    %v541 = vpop.f32.mrf.mxu0
    %v542 = vadd.f32 %v409, %v541
    %v543 = vpop.f32.mrf.mxu0
    %v544 = vadd.f32 %v405, %v543
    %v545 = vpop.f32.mrf.mxu0
    %v546 = vadd.f32 %v409, %v545
    %547 = vdwg.mxu0
    %548 = vmatprep.subr.bf16.mxu0 0
    %549 = vmatpush1.bf16.msra.mxu0 0
    %550 = vmatprep.subr.bf16.mxu0 0
    %551 = vmatpush1.bf16.msra.mxu0 0
    %552 = vmatprep.subr.bf16.mxu0 0
    %553 = vmatpush1.bf16.msra.mxu0 0
    %554 = vmatprep.subr.bf16.mxu0 0
    %555 = vmatpush1.bf16.msra.mxu0 0
    %556 = vmatprep.subr.bf16.mxu0 0
    %557 = vmatpush1.bf16.msra.mxu0 0
    %558 = vmatprep.subr.bf16.mxu0 0
    %559 = vmatpush1.bf16.msra.mxu0 0
    %560 = vmatprep.subr.bf16.mxu0 %v453
    %561 = vmatpush1.bf16.msra.mxu0 %v452
    %562 = vmatprep.subr.bf16.mxu0 %v449
    %563 = vmatpush1.bf16.msra.mxu0 %v448
    %564 = vmatprep.subr.bf16.mxu0 0
    %565 = vmatpush2.bf16.msra.mxu0 0
    %566 = vmatprep.subr.bf16.mxu0 0
    %567 = vmatpush2.bf16.msra.mxu0 0
    %568 = vmatprep.subr.bf16.mxu0 0
    %569 = vmatpush2.bf16.msra.mxu0 0
    %570 = vmatprep.subr.bf16.mxu0 0
    %571 = vmatpush2.bf16.msra.mxu0 0
    %572 = vmatprep.subr.bf16.mxu0 0
    %573 = vmatpush2.bf16.msra.mxu0 0
    %574 = vmatprep.subr.bf16.mxu0 0
    %575 = vmatpush2.bf16.msra.mxu0 0
    %576 = vmatprep.subr.bf16.mxu0 0
    %577 = vmatpush2.bf16.msra.mxu0 0
    %578 = vmatprep.subr.bf16.mxu0 0
    %579 = vmatpush2.bf16.msra.mxu0 0
    %580 = vmatprep.mubr.bf16.mxu0 0
    %581 = vmatmul.mubr.bf16.gmra.mxu0 %v464
    %v582 = vpop.f32.mrf.mxu0
    %v583 = vadd.f32 %v413, %v582
    %v584 = vpop.f32.mrf.mxu0
    %v585 = vadd.f32 %v417, %v584
    %v586 = vpop.f32.mrf.mxu0
    %v587 = vadd.f32 %v413, %v586
    %v588 = vpop.f32.mrf.mxu0
    %v589 = vadd.f32 %v417, %v588
    %590 = vmatprep.mubr.bf16.mxu0 0
    %591 = vmatmul.mubr.bf16.gmra.mxu0 %v467
    %v592 = vpop.f32.mrf.mxu0
    %v593 = vadd.f32 %v413, %v592
    %v594 = vpop.f32.mrf.mxu0
    %v595 = vadd.f32 %v417, %v594
    %v596 = vpop.f32.mrf.mxu0
    %v597 = vadd.f32 %v413, %v596
    %v598 = vpop.f32.mrf.mxu0
    %v599 = vadd.f32 %v417, %v598
    %600 = vmatprep.mubr.bf16.mxu0 0
    %601 = vmatmul.mubr.bf16.gmra.mxu0 %v470
    %v602 = vpop.f32.mrf.mxu0
    %v603 = vadd.f32 %v413, %v602
    %v604 = vpop.f32.mrf.mxu0
    %v605 = vadd.f32 %v417, %v604
    %v606 = vpop.f32.mrf.mxu0
    %v607 = vadd.f32 %v413, %v606
    %v608 = vpop.f32.mrf.mxu0
    %v609 = vadd.f32 %v417, %v608
    %610 = vmatprep.mubr.bf16.mxu0 0
    %611 = vmatmul.mubr.bf16.gmra.mxu0 %v473
    %v612 = vpop.f32.mrf.mxu0
    %v613 = vadd.f32 %v413, %v612
    %v614 = vpop.f32.mrf.mxu0
    %v615 = vadd.f32 %v417, %v614
    %v616 = vpop.f32.mrf.mxu0
    %v617 = vadd.f32 %v413, %v616
    %v618 = vpop.f32.mrf.mxu0
    %v619 = vadd.f32 %v417, %v618
    %620 = vdwg.mxu0
    %v621 = vpack.c.bf16 %v510, %v510
    %v622 = vpack.c.bf16 %v512, %v512
    %v623 = vpack.c.bf16 %v583, %v583
    %v624 = vpack.c.bf16 %v585, %v585
    %v625 = vpack.c.bf16 %v514, %v514
    %v626 = vpack.c.bf16 %v516, %v516
    %v627 = vpack.c.bf16 %v587, %v587
    %v628 = vpack.c.bf16 %v589, %v589
    %v629 = vpack.c.bf16 %v520, %v520
    %v630 = vpack.c.bf16 %v522, %v522
    %v631 = vpack.c.bf16 %v593, %v593
    %v632 = vpack.c.bf16 %v595, %v595
    %v633 = vpack.c.bf16 %v524, %v524
    %v634 = vpack.c.bf16 %v526, %v526
    %v635 = vpack.c.bf16 %v597, %v597
    %v636 = vpack.c.bf16 %v599, %v599
    %v637 = vpack.c.bf16 %v530, %v530
    %v638 = vpack.c.bf16 %v532, %v532
    %v639 = vpack.c.bf16 %v603, %v603
    %v640 = vpack.c.bf16 %v605, %v605
    %v641 = vpack.c.bf16 %v534, %v534
    %v642 = vpack.c.bf16 %v536, %v536
    %v643 = vpack.c.bf16 %v607, %v607
    %v644 = vpack.c.bf16 %v609, %v609
    %v645 = vpack.c.bf16 %v540, %v540
    %v646 = vpack.c.bf16 %v542, %v542
    %v647 = vpack.c.bf16 %v613, %v613
    %v648 = vpack.c.bf16 %v615, %v615
    %v649 = vpack.c.bf16 %v544, %v544
    %v650 = vpack.c.bf16 %v546, %v546
    %v651 = vpack.c.bf16 %v617, %v617
    %v652 = vpack.c.bf16 %v619, %v619
    %v685 = vunpack.c.l.b16 %v621
    %v686 = vunpack.c.l.b16 %v622
    %v687 = vunpack.c.l.b16 %v623
    %v688 = vunpack.c.l.b16 %v624
    %v689 = vunpack.c.l.b16 %v625
    %v690 = vunpack.c.l.b16 %v626
    %v691 = vunpack.c.l.b16 %v627
    %v692 = vunpack.c.l.b16 %v628
    %v693 = vunpack.c.l.b16 %v629
    %v694 = vunpack.c.l.b16 %v630
    %v695 = vunpack.c.l.b16 %v631
    %v696 = vunpack.c.l.b16 %v632
    %v697 = vunpack.c.l.b16 %v633
    %v698 = vunpack.c.l.b16 %v634
    %v699 = vunpack.c.l.b16 %v635
    %v700 = vunpack.c.l.b16 %v636
    %v701 = vunpack.c.l.b16 %v637
    %v702 = vunpack.c.l.b16 %v638
    %v703 = vunpack.c.l.b16 %v639
    %v704 = vunpack.c.l.b16 %v640
    %v705 = vunpack.c.l.b16 %v641
    %v706 = vunpack.c.l.b16 %v642
    %v707 = vunpack.c.l.b16 %v643
    %v708 = vunpack.c.l.b16 %v644
    %v709 = vunpack.c.l.b16 %v645
    %v710 = vunpack.c.l.b16 %v646
    %v711 = vunpack.c.l.b16 %v647
    %v712 = vunpack.c.l.b16 %v648
    %v713 = vunpack.c.l.b16 %v649
    %v714 = vunpack.c.l.b16 %v650
    %v715 = vunpack.c.l.b16 %v651
    %v716 = vunpack.c.l.b16 %v652
    %v717 = vpack.c.b16 %v686, %v685
    %v718 = vpack.c.b16 %v688, %v687
    %v719 = vpack.c.b16 %v690, %v689
    %v720 = vpack.c.b16 %v692, %v691
    %v721 = vpack.c.b16 %v694, %v693
    %v722 = vpack.c.b16 %v696, %v695
    %v723 = vpack.c.b16 %v698, %v697
    %v724 = vpack.c.b16 %v700, %v699
    %v725 = vpack.c.b16 %v702, %v701
    %v726 = vpack.c.b16 %v704, %v703
    %v727 = vpack.c.b16 %v706, %v705
    %v728 = vpack.c.b16 %v708, %v707
    %v729 = vpack.c.b16 %v710, %v709
    %v730 = vpack.c.b16 %v712, %v711
    %v731 = vpack.c.b16 %v714, %v713
    %v732 = vpack.c.b16 %v716, %v715
    %749 = vst [vmem:[#allocation2] sm:$0xff] %v717
    %750 = vst [vmem:[#allocation2 + $0x8] sm:$0xff] %v718
    %751 = vst [vmem:[#allocation2 + $0x10] sm:$0xff] %v719
    %752 = vst [vmem:[#allocation2 + $0x18] sm:$0xff] %v720
    %753 = vst [vmem:[#allocation2 + $0x20] sm:$0xff] %v721
    %754 = vst [vmem:[#allocation2 + $0x28] sm:$0xff] %v722
    %755 = vst [vmem:[#allocation2 + $0x30] sm:$0xff] %v723
    %756 = vst [vmem:[#allocation2 + $0x38] sm:$0xff] %v724
    %757 = vst [vmem:[#allocation2 + $0x40] sm:$0xff] %v725
    %758 = vst [vmem:[#allocation2 + $0x48] sm:$0xff] %v726
    %759 = vst [vmem:[#allocation2 + $0x50] sm:$0xff] %v727
    %760 = vst [vmem:[#allocation2 + $0x58] sm:$0xff] %v728
    %761 = vst [vmem:[#allocation2 + $0x60] sm:$0xff] %v729
    %762 = vst [vmem:[#allocation2 + $0x68] sm:$0xff] %v730
    %763 = vst [vmem:[#allocation2 + $0x70] sm:$0xff] %v731
    %764 = vst [vmem:[#allocation2 + $0x78] sm:$0xff] %v732
    %v765 = vld [vmem:[#allocation2] sm:$0xff]
    %v766 = vld [vmem:[#allocation2 + $0x8] sm:$0xff]
    %v767 = vunpack.c.l.bf16 %v765
    %v768 = vunpack.c.h.bf16 %v765
    %v769 = vunpack.c.l.bf16 %v766
    %v770 = vunpack.c.h.bf16 %v766
    %v771 = vld [vmem:[#allocation9] sm:$0xff]
    %v772 = vld [vmem:[#allocation9 + $0x8] sm:$0xff]
    %v773 = vld [vmem:[#allocation9 + $0x10] sm:$0xff]
    %v774 = vld [vmem:[#allocation9 + $0x18] sm:$0xff]
    %v775 = vld [vmem:[#allocation9 + $0x20] sm:$0xff]
    %v776 = vld [vmem:[#allocation9 + $0x28] sm:$0xff]
    %v777 = vld [vmem:[#allocation9 + $0x30] sm:$0xff]
    %v778 = vld [vmem:[#allocation9 + $0x38] sm:$0xff]
    %v779 = vld [vmem:[#allocation9 + $0x40] sm:$0xff]
    %v780 = vld [vmem:[#allocation9 + $0x48] sm:$0xff]
    %v781 = vld [vmem:[#allocation9 + $0x50] sm:$0xff]
    %v782 = vld [vmem:[#allocation9 + $0x58] sm:$0xff]
    %v783 = vld [vmem:[#allocation9 + $0x60] sm:$0xff]
    %v784 = vld [vmem:[#allocation9 + $0x68] sm:$0xff]
    %v785 = vld [vmem:[#allocation9 + $0x70] sm:$0xff]
    %v786 = vld [vmem:[#allocation9 + $0x78] sm:$0xff]
    %v787 = vld [vmem:[#allocation9 + $0x80] sm:$0xff]
    %v788 = vld [vmem:[#allocation9 + $0x88] sm:$0xff]
    %v789 = vld [vmem:[#allocation9 + $0x90] sm:$0xff]
    %v790 = vld [vmem:[#allocation9 + $0x98] sm:$0xff]
    %v791 = vld [vmem:[#allocation9 + $0xa0] sm:$0xff]
    %v792 = vld [vmem:[#allocation9 + $0xa8] sm:$0xff]
    %v793 = vld [vmem:[#allocation9 + $0xb0] sm:$0xff]
    %v794 = vld [vmem:[#allocation9 + $0xb8] sm:$0xff]
    %v795 = vld [vmem:[#allocation9 + $0xc0] sm:$0xff]
    %v796 = vld [vmem:[#allocation9 + $0xc8] sm:$0xff]
    %v797 = vld [vmem:[#allocation9 + $0xd0] sm:$0xff]
    %v798 = vld [vmem:[#allocation9 + $0xd8] sm:$0xff]
    %v799 = vld [vmem:[#allocation9 + $0xe0] sm:$0xff]
    %v800 = vld [vmem:[#allocation9 + $0xe8] sm:$0xff]
    %v801 = vld [vmem:[#allocation9 + $0xf0] sm:$0xff]
    %v802 = vld [vmem:[#allocation9 + $0xf8] sm:$0xff]
    %v835 = vunpack.c.l.b16 %v771
    %v836 = vunpack.c.h.b16 %v771
    %v837 = vunpack.c.l.b16 %v772
    %v838 = vunpack.c.h.b16 %v772
    %v839 = vunpack.c.l.b16 %v773
    %v840 = vunpack.c.h.b16 %v773
    %v841 = vunpack.c.l.b16 %v774
    %v842 = vunpack.c.h.b16 %v774
    %v843 = vunpack.c.l.b16 %v775
    %v844 = vunpack.c.h.b16 %v775
    %v845 = vunpack.c.l.b16 %v776
    %v846 = vunpack.c.h.b16 %v776
    %v847 = vunpack.c.l.b16 %v777
    %v848 = vunpack.c.h.b16 %v777
    %v849 = vunpack.c.l.b16 %v778
    %v850 = vunpack.c.h.b16 %v778
    %v851 = vunpack.c.l.b16 %v779
    %v852 = vunpack.c.h.b16 %v779
    %v853 = vunpack.c.l.b16 %v780
    %v854 = vunpack.c.h.b16 %v780
    %v855 = vunpack.c.l.b16 %v781
    %v856 = vunpack.c.h.b16 %v781
    %v857 = vunpack.c.l.b16 %v782
    %v858 = vunpack.c.h.b16 %v782
    %v859 = vunpack.c.l.b16 %v783
    %v860 = vunpack.c.h.b16 %v783
    %v861 = vunpack.c.l.b16 %v784
    %v862 = vunpack.c.h.b16 %v784
    %v863 = vunpack.c.l.b16 %v785
    %v864 = vunpack.c.h.b16 %v785
    %v865 = vunpack.c.l.b16 %v786
    %v866 = vunpack.c.h.b16 %v786
    %v867 = vunpack.c.l.b16 %v787
    %v868 = vunpack.c.h.b16 %v787
    %v869 = vunpack.c.l.b16 %v788
    %v870 = vunpack.c.h.b16 %v788
    %v871 = vunpack.c.l.b16 %v789
    %v872 = vunpack.c.h.b16 %v789
    %v873 = vunpack.c.l.b16 %v790
    %v874 = vunpack.c.h.b16 %v790
    %v875 = vunpack.c.l.b16 %v791
    %v876 = vunpack.c.h.b16 %v791
    %v877 = vunpack.c.l.b16 %v792
    %v878 = vunpack.c.h.b16 %v792
    %v879 = vunpack.c.l.b16 %v793
    %v880 = vunpack.c.h.b16 %v793
    %v881 = vunpack.c.l.b16 %v794
    %v882 = vunpack.c.h.b16 %v794
    %v883 = vunpack.c.l.b16 %v795
    %v884 = vunpack.c.h.b16 %v795
    %v885 = vunpack.c.l.b16 %v796
    %v886 = vunpack.c.h.b16 %v796
    %v887 = vunpack.c.l.b16 %v797
    %v888 = vunpack.c.h.b16 %v797
    %v889 = vunpack.c.l.b16 %v798
    %v890 = vunpack.c.h.b16 %v798
    %v891 = vunpack.c.l.b16 %v799
    %v892 = vunpack.c.h.b16 %v799
    %v893 = vunpack.c.l.b16 %v800
    %v894 = vunpack.c.h.b16 %v800
    %v895 = vunpack.c.l.b16 %v801
    %v896 = vunpack.c.h.b16 %v801
    %v897 = vunpack.c.l.b16 %v802
    %v898 = vunpack.c.h.b16 %v802
    %v899 = vpack.c.b16 %v839, %v835
    %v900 = vpack.c.b16 %v840, %v836
    %v901 = vpack.c.b16 %v841, %v837
    %v902 = vpack.c.b16 %v842, %v838
    %v903 = vpack.c.b16 %v847, %v843
    %v904 = vpack.c.b16 %v848, %v844
    %v905 = vpack.c.b16 %v849, %v845
    %v906 = vpack.c.b16 %v850, %v846
    %v907 = vpack.c.b16 %v855, %v851
    %v908 = vpack.c.b16 %v856, %v852
    %v909 = vpack.c.b16 %v857, %v853
    %v910 = vpack.c.b16 %v858, %v854
    %v911 = vpack.c.b16 %v863, %v859
    %v912 = vpack.c.b16 %v864, %v860
    %v913 = vpack.c.b16 %v865, %v861
    %v914 = vpack.c.b16 %v866, %v862
    %v915 = vpack.c.b16 %v871, %v867
    %v916 = vpack.c.b16 %v872, %v868
    %v917 = vpack.c.b16 %v873, %v869
    %v918 = vpack.c.b16 %v874, %v870
    %v919 = vpack.c.b16 %v879, %v875
    %v920 = vpack.c.b16 %v880, %v876
    %v921 = vpack.c.b16 %v881, %v877
    %v922 = vpack.c.b16 %v882, %v878
    %v923 = vpack.c.b16 %v887, %v883
    %v924 = vpack.c.b16 %v888, %v884
    %v925 = vpack.c.b16 %v889, %v885
    %v926 = vpack.c.b16 %v890, %v886
    %v927 = vpack.c.b16 %v895, %v891
    %v928 = vpack.c.b16 %v896, %v892
    %v929 = vpack.c.b16 %v897, %v893
    %v930 = vpack.c.b16 %v898, %v894
    %963 = vmatprep.subr.bf16.mxu0 %v928
    %964 = vmatpush1.bf16.msra.mxu0 %v927
    %965 = vmatprep.subr.bf16.mxu0 %v924
    %966 = vmatpush1.bf16.msra.mxu0 %v923
    %967 = vmatprep.subr.bf16.mxu0 %v920
    %968 = vmatpush1.bf16.msra.mxu0 %v919
    %969 = vmatprep.subr.bf16.mxu0 %v916
    %970 = vmatpush1.bf16.msra.mxu0 %v915
    %971 = vmatprep.subr.bf16.mxu0 %v912
    %972 = vmatpush1.bf16.msra.mxu0 %v911
    %973 = vmatprep.subr.bf16.mxu0 %v908
    %974 = vmatpush1.bf16.msra.mxu0 %v907
    %975 = vmatprep.subr.bf16.mxu0 %v904
    %976 = vmatpush1.bf16.msra.mxu0 %v903
    %977 = vmatprep.subr.bf16.mxu0 %v900
    %978 = vmatpush1.bf16.msra.mxu0 %v899
    %979 = vmatprep.subr.bf16.mxu0 0
    %980 = vmatpush2.bf16.msra.mxu0 0
    %981 = vmatprep.subr.bf16.mxu0 0
    %982 = vmatpush2.bf16.msra.mxu0 0
    %983 = vmatprep.subr.bf16.mxu0 0
    %984 = vmatpush2.bf16.msra.mxu0 0
    %985 = vmatprep.subr.bf16.mxu0 0
    %986 = vmatpush2.bf16.msra.mxu0 0
    %987 = vmatprep.subr.bf16.mxu0 0
    %988 = vmatpush2.bf16.msra.mxu0 0
    %989 = vmatprep.subr.bf16.mxu0 0
    %990 = vmatpush2.bf16.msra.mxu0 0
    %991 = vmatprep.subr.bf16.mxu0 0
    %992 = vmatpush2.bf16.msra.mxu0 0
    %993 = vmatprep.subr.bf16.mxu0 0
    %994 = vmatpush2.bf16.msra.mxu0 0
    %995 = vmatprep.mubr.bf16.mxu0 0
    %996 = vmatmul.mubr.bf16.gmra.mxu0 0
    %v997 = vpop.f32.mrf.mxu0
    %v998 = vadd.f32 0.0, %v997
    %v999 = vpop.f32.mrf.mxu0
    %v1000 = vadd.f32 0.0, %v999
    %v1001 = vpop.f32.mrf.mxu0
    %v1002 = vpop.f32.mrf.mxu0
    %1003 = vdwg.mxu0
    %1004 = vmatprep.subr.bf16.mxu0 %v930
    %1005 = vmatpush1.bf16.msra.mxu0 %v929
    %1006 = vmatprep.subr.bf16.mxu0 %v926
    %1007 = vmatpush1.bf16.msra.mxu0 %v925
    %1008 = vmatprep.subr.bf16.mxu0 %v922
    %1009 = vmatpush1.bf16.msra.mxu0 %v921
    %1010 = vmatprep.subr.bf16.mxu0 %v918
    %1011 = vmatpush1.bf16.msra.mxu0 %v917
    %1012 = vmatprep.subr.bf16.mxu0 %v914
    %1013 = vmatpush1.bf16.msra.mxu0 %v913
    %1014 = vmatprep.subr.bf16.mxu0 %v910
    %1015 = vmatpush1.bf16.msra.mxu0 %v909
    %1016 = vmatprep.subr.bf16.mxu0 %v906
    %1017 = vmatpush1.bf16.msra.mxu0 %v905
    %1018 = vmatprep.subr.bf16.mxu0 %v902
    %1019 = vmatpush1.bf16.msra.mxu0 %v901
    %1020 = vmatprep.subr.bf16.mxu0 0
    %1021 = vmatpush2.bf16.msra.mxu0 0
    %1022 = vmatprep.subr.bf16.mxu0 0
    %1023 = vmatpush2.bf16.msra.mxu0 0
    %1024 = vmatprep.subr.bf16.mxu0 0
    %1025 = vmatpush2.bf16.msra.mxu0 0
    %1026 = vmatprep.subr.bf16.mxu0 0
    %1027 = vmatpush2.bf16.msra.mxu0 0
    %1028 = vmatprep.subr.bf16.mxu0 0
    %1029 = vmatpush2.bf16.msra.mxu0 0
    %1030 = vmatprep.subr.bf16.mxu0 0
    %1031 = vmatpush2.bf16.msra.mxu0 0
    %1032 = vmatprep.subr.bf16.mxu0 0
    %1033 = vmatpush2.bf16.msra.mxu0 0
    %1034 = vmatprep.subr.bf16.mxu0 0
    %1035 = vmatpush2.bf16.msra.mxu0 0
    %1036 = vmatprep.mubr.bf16.mxu0 0
    %1037 = vmatmul.mubr.bf16.gmra.mxu0 0
    %v1038 = vpop.f32.mrf.mxu0
    %v1039 = vadd.f32 0.0, %v1038
    %v1040 = vpop.f32.mrf.mxu0
    %v1041 = vadd.f32 0.0, %v1040
    %v1042 = vpop.f32.mrf.mxu0
    %v1043 = vpop.f32.mrf.mxu0
    %1044 = vdwg.mxu0
    %v1045 = vadd.f32 %v767, %v998
    %v1046 = vadd.f32 %v768, %v1000
    %v1047 = vadd.f32 %v769, %v1039
    %v1048 = vadd.f32 %v770, %v1041
    %v1049 = vxor.u32 %v1045, 2147483648
    %v1050 = vmul.f32 %v1049, 1.442695
    %v1051 = vpow.pop %v1050
    %v1052 = vadd.f32 %v1051, 1.0
    %v1053 = vrcp.pop %v1052
    %v1054 = vmul.f32 1.0, %v1053
    %v1055 = vxor.u32 %v1046, 2147483648
    %v1056 = vmul.f32 %v1055, 1.442695
    %v1057 = vpow.pop %v1056
    %v1058 = vadd.f32 %v1057, 1.0
    %v1059 = vrcp.pop %v1058
    %v1060 = vmul.f32 1.0, %v1059
    %v1061 = vtanh.pop %v1047
    %v1062 = vxor.u32 %v1048, 2147483648
    %v1063 = vmul.f32 %v1062, 1.442695
    %v1064 = vpow.pop %v1063
    %v1065 = vadd.f32 %v1064, 1.0
    %v1066 = vrcp.pop %v1065
    %v1067 = vmul.f32 1.0, %v1066
    %v1068 = vmul.f32 %v1060, 0.0
    %v1069 = vmul.f32 %v1054, %v1061
    %v1070 = vadd.f32 %v1068, %v1069
    %v1071 = vtanh.pop %v1070
    %v1072 = vmul.f32 %v1067, %v1071
    %s1073 = scalar_lea.vmem [#allocation2], 16
    %v1074 = vld [vmem:[%s1073] sm:$0xff]
    %v1075 = vld [vmem:[%s1073 + $0x8] sm:$0xff]
    %v1076 = vunpack.c.l.bf16 %v1074
    %v1077 = vunpack.c.h.bf16 %v1074
    %v1078 = vunpack.c.l.bf16 %v1075
    %v1079 = vunpack.c.h.bf16 %v1075
    %v1080 = vpack.c.bf16 %v1072, %v1072
    %1081 = vmatprep.subr.bf16.mxu0 %v928
    %1082 = vmatpush1.bf16.msra.mxu0 %v927
    %1083 = vmatprep.subr.bf16.mxu0 %v924
    %1084 = vmatpush1.bf16.msra.mxu0 %v923
    %1085 = vmatprep.subr.bf16.mxu0 %v920
    %1086 = vmatpush1.bf16.msra.mxu0 %v919
    %1087 = vmatprep.subr.bf16.mxu0 %v916
    %1088 = vmatpush1.bf16.msra.mxu0 %v915
    %1089 = vmatprep.subr.bf16.mxu0 %v912
    %1090 = vmatpush1.bf16.msra.mxu0 %v911
    %1091 = vmatprep.subr.bf16.mxu0 %v908
    %1092 = vmatpush1.bf16.msra.mxu0 %v907
    %1093 = vmatprep.subr.bf16.mxu0 %v904
    %1094 = vmatpush1.bf16.msra.mxu0 %v903
    %1095 = vmatprep.subr.bf16.mxu0 %v900
    %1096 = vmatpush1.bf16.msra.mxu0 %v899
    %1097 = vmatprep.subr.bf16.mxu0 0
    %1098 = vmatpush2.bf16.msra.mxu0 0
    %1099 = vmatprep.subr.bf16.mxu0 0
    %1100 = vmatpush2.bf16.msra.mxu0 0
    %1101 = vmatprep.subr.bf16.mxu0 0
    %1102 = vmatpush2.bf16.msra.mxu0 0
    %1103 = vmatprep.subr.bf16.mxu0 0
    %1104 = vmatpush2.bf16.msra.mxu0 0
    %1105 = vmatprep.subr.bf16.mxu0 0
    %1106 = vmatpush2.bf16.msra.mxu0 0
    %1107 = vmatprep.subr.bf16.mxu0 0
    %1108 = vmatpush2.bf16.msra.mxu0 0
    %1109 = vmatprep.subr.bf16.mxu0 0
    %1110 = vmatpush2.bf16.msra.mxu0 0
    %1111 = vmatprep.subr.bf16.mxu0 0
    %1112 = vmatpush2.bf16.msra.mxu0 0
    %1113 = vmatprep.mubr.bf16.mxu0 0
    %1114 = vmatmul.mubr.bf16.gmra.mxu0 %v1080
    %v1115 = vpop.f32.mrf.mxu0
    %v1116 = vadd.f32 0.0, %v1115
    %v1117 = vpop.f32.mrf.mxu0
    %v1118 = vadd.f32 0.0, %v1117
    %v1119 = vpop.f32.mrf.mxu0
    %v1120 = vpop.f32.mrf.mxu0
    %1121 = vdwg.mxu0
    %1122 = vmatprep.subr.bf16.mxu0 %v930
    %1123 = vmatpush1.bf16.msra.mxu0 %v929
    %1124 = vmatprep.subr.bf16.mxu0 %v926
    %1125 = vmatpush1.bf16.msra.mxu0 %v925
    %1126 = vmatprep.subr.bf16.mxu0 %v922
    %1127 = vmatpush1.bf16.msra.mxu0 %v921
    %1128 = vmatprep.subr.bf16.mxu0 %v918
    %1129 = vmatpush1.bf16.msra.mxu0 %v917
    %1130 = vmatprep.subr.bf16.mxu0 %v914
    %1131 = vmatpush1.bf16.msra.mxu0 %v913
    %1132 = vmatprep.subr.bf16.mxu0 %v910
    %1133 = vmatpush1.bf16.msra.mxu0 %v909
    %1134 = vmatprep.subr.bf16.mxu0 %v906
    %1135 = vmatpush1.bf16.msra.mxu0 %v905
    %1136 = vmatprep.subr.bf16.mxu0 %v902
    %1137 = vmatpush1.bf16.msra.mxu0 %v901
    %1138 = vmatprep.subr.bf16.mxu0 0
    %1139 = vmatpush2.bf16.msra.mxu0 0
    %1140 = vmatprep.subr.bf16.mxu0 0
    %1141 = vmatpush2.bf16.msra.mxu0 0
    %1142 = vmatprep.subr.bf16.mxu0 0
    %1143 = vmatpush2.bf16.msra.mxu0 0
    %1144 = vmatprep.subr.bf16.mxu0 0
    %1145 = vmatpush2.bf16.msra.mxu0 0
    %1146 = vmatprep.subr.bf16.mxu0 0
    %1147 = vmatpush2.bf16.msra.mxu0 0
    %1148 = vmatprep.subr.bf16.mxu0 0
    %1149 = vmatpush2.bf16.msra.mxu0 0
    %1150 = vmatprep.subr.bf16.mxu0 0
    %1151 = vmatpush2.bf16.msra.mxu0 0
    %1152 = vmatprep.subr.bf16.mxu0 0
    %1153 = vmatpush2.bf16.msra.mxu0 0
    %1154 = vmatprep.mubr.bf16.mxu0 0
    %1155 = vmatmul.mubr.bf16.gmra.mxu0 %v1080
    %v1156 = vpop.f32.mrf.mxu0
    %v1157 = vadd.f32 0.0, %v1156
    %v1158 = vpop.f32.mrf.mxu0
    %v1159 = vadd.f32 0.0, %v1158
    %v1160 = vpop.f32.mrf.mxu0
    %v1161 = vpop.f32.mrf.mxu0
    %1162 = vdwg.mxu0
    %v1163 = vadd.f32 %v1076, %v1116
    %v1164 = vadd.f32 %v1077, %v1118
    %v1165 = vadd.f32 %v1078, %v1157
    %v1166 = vadd.f32 %v1079, %v1159
    %v1167 = vxor.u32 %v1163, 2147483648
    %v1168 = vmul.f32 %v1167, 1.442695
    %v1169 = vpow.pop %v1168
    %v1170 = vadd.f32 %v1169, 1.0
    %v1171 = vrcp.pop %v1170
    %v1172 = vmul.f32 1.0, %v1171
    %v1173 = vxor.u32 %v1164, 2147483648
    %v1174 = vmul.f32 %v1173, 1.442695
    %v1175 = vpow.pop %v1174
    %v1176 = vadd.f32 %v1175, 1.0
    %v1177 = vrcp.pop %v1176
    %v1178 = vmul.f32 1.0, %v1177
    %v1179 = vtanh.pop %v1165
    %v1180 = vxor.u32 %v1166, 2147483648
    %v1181 = vmul.f32 %v1180, 1.442695
    %v1182 = vpow.pop %v1181
    %v1183 = vadd.f32 %v1182, 1.0
    %v1184 = vrcp.pop %v1183
    %v1185 = vmul.f32 1.0, %v1184
    %v1186 = vmul.f32 %v1178, %v1070
    %v1187 = vmul.f32 %v1172, %v1179
    %v1188 = vadd.f32 %v1186, %v1187
    %v1189 = vtanh.pop %v1188
    %v1190 = vmul.f32 %v1185, %v1189
    %s1191 = scalar_lea.vmem [#allocation2], 32
    %v1192 = vld [vmem:[%s1191] sm:$0xff]
    %v1193 = vld [vmem:[%s1191 + $0x8] sm:$0xff]
    %v1194 = vunpack.c.l.bf16 %v1192
    %v1195 = vunpack.c.h.bf16 %v1192
    %v1196 = vunpack.c.l.bf16 %v1193
    %v1197 = vunpack.c.h.bf16 %v1193
    %v1198 = vpack.c.bf16 %v1190, %v1190
    %1199 = vmatprep.subr.bf16.mxu0 %v928
    %1200 = vmatpush1.bf16.msra.mxu0 %v927
    %1201 = vmatprep.subr.bf16.mxu0 %v924
    %1202 = vmatpush1.bf16.msra.mxu0 %v923
    %1203 = vmatprep.subr.bf16.mxu0 %v920
    %1204 = vmatpush1.bf16.msra.mxu0 %v919
    %1205 = vmatprep.subr.bf16.mxu0 %v916
    %1206 = vmatpush1.bf16.msra.mxu0 %v915
    %1207 = vmatprep.subr.bf16.mxu0 %v912
    %1208 = vmatpush1.bf16.msra.mxu0 %v911
    %1209 = vmatprep.subr.bf16.mxu0 %v908
    %1210 = vmatpush1.bf16.msra.mxu0 %v907
    %1211 = vmatprep.subr.bf16.mxu0 %v904
    %1212 = vmatpush1.bf16.msra.mxu0 %v903
    %1213 = vmatprep.subr.bf16.mxu0 %v900
    %1214 = vmatpush1.bf16.msra.mxu0 %v899
    %1215 = vmatprep.subr.bf16.mxu0 0
    %1216 = vmatpush2.bf16.msra.mxu0 0
    %1217 = vmatprep.subr.bf16.mxu0 0
    %1218 = vmatpush2.bf16.msra.mxu0 0
    %1219 = vmatprep.subr.bf16.mxu0 0
    %1220 = vmatpush2.bf16.msra.mxu0 0
    %1221 = vmatprep.subr.bf16.mxu0 0
    %1222 = vmatpush2.bf16.msra.mxu0 0
    %1223 = vmatprep.subr.bf16.mxu0 0
    %1224 = vmatpush2.bf16.msra.mxu0 0
    %1225 = vmatprep.subr.bf16.mxu0 0
    %1226 = vmatpush2.bf16.msra.mxu0 0
    %1227 = vmatprep.subr.bf16.mxu0 0
    %1228 = vmatpush2.bf16.msra.mxu0 0
    %1229 = vmatprep.subr.bf16.mxu0 0
    %1230 = vmatpush2.bf16.msra.mxu0 0
    %1231 = vmatprep.mubr.bf16.mxu0 0
    %1232 = vmatmul.mubr.bf16.gmra.mxu0 %v1198
    %v1233 = vpop.f32.mrf.mxu0
    %v1234 = vadd.f32 0.0, %v1233
    %v1235 = vpop.f32.mrf.mxu0
    %v1236 = vadd.f32 0.0, %v1235
    %v1237 = vpop.f32.mrf.mxu0
    %v1238 = vpop.f32.mrf.mxu0
    %1239 = vdwg.mxu0
    %1240 = vmatprep.subr.bf16.mxu0 %v930
    %1241 = vmatpush1.bf16.msra.mxu0 %v929
    %1242 = vmatprep.subr.bf16.mxu0 %v926
    %1243 = vmatpush1.bf16.msra.mxu0 %v925
    %1244 = vmatprep.subr.bf16.mxu0 %v922
    %1245 = vmatpush1.bf16.msra.mxu0 %v921
    %1246 = vmatprep.subr.bf16.mxu0 %v918
    %1247 = vmatpush1.bf16.msra.mxu0 %v917
    %1248 = vmatprep.subr.bf16.mxu0 %v914
    %1249 = vmatpush1.bf16.msra.mxu0 %v913
    %1250 = vmatprep.subr.bf16.mxu0 %v910
    %1251 = vmatpush1.bf16.msra.mxu0 %v909
    %1252 = vmatprep.subr.bf16.mxu0 %v906
    %1253 = vmatpush1.bf16.msra.mxu0 %v905
    %1254 = vmatprep.subr.bf16.mxu0 %v902
    %1255 = vmatpush1.bf16.msra.mxu0 %v901
    %1256 = vmatprep.subr.bf16.mxu0 0
    %1257 = vmatpush2.bf16.msra.mxu0 0
    %1258 = vmatprep.subr.bf16.mxu0 0
    %1259 = vmatpush2.bf16.msra.mxu0 0
    %1260 = vmatprep.subr.bf16.mxu0 0
    %1261 = vmatpush2.bf16.msra.mxu0 0
    %1262 = vmatprep.subr.bf16.mxu0 0
    %1263 = vmatpush2.bf16.msra.mxu0 0
    %1264 = vmatprep.subr.bf16.mxu0 0
    %1265 = vmatpush2.bf16.msra.mxu0 0
    %1266 = vmatprep.subr.bf16.mxu0 0
    %1267 = vmatpush2.bf16.msra.mxu0 0
    %1268 = vmatprep.subr.bf16.mxu0 0
    %1269 = vmatpush2.bf16.msra.mxu0 0
    %1270 = vmatprep.subr.bf16.mxu0 0
    %1271 = vmatpush2.bf16.msra.mxu0 0
    %1272 = vmatprep.mubr.bf16.mxu0 0
    %1273 = vmatmul.mubr.bf16.gmra.mxu0 %v1198
    %v1274 = vpop.f32.mrf.mxu0
    %v1275 = vadd.f32 0.0, %v1274
    %v1276 = vpop.f32.mrf.mxu0
    %v1277 = vadd.f32 0.0, %v1276
    %v1278 = vpop.f32.mrf.mxu0
    %v1279 = vpop.f32.mrf.mxu0
    %1280 = vdwg.mxu0
    %v1281 = vadd.f32 %v1194, %v1234
    %v1282 = vadd.f32 %v1195, %v1236
    %v1283 = vadd.f32 %v1196, %v1275
    %v1284 = vadd.f32 %v1197, %v1277
    %v1285 = vxor.u32 %v1281, 2147483648
    %v1286 = vmul.f32 %v1285, 1.442695
    %v1287 = vpow.pop %v1286
    %v1288 = vadd.f32 %v1287, 1.0
    %v1289 = vrcp.pop %v1288
    %v1290 = vmul.f32 1.0, %v1289
    %v1291 = vxor.u32 %v1282, 2147483648
    %v1292 = vmul.f32 %v1291, 1.442695
    %v1293 = vpow.pop %v1292
    %v1294 = vadd.f32 %v1293, 1.0
    %v1295 = vrcp.pop %v1294
    %v1296 = vmul.f32 1.0, %v1295
    %v1297 = vtanh.pop %v1283
    %v1298 = vxor.u32 %v1284, 2147483648
    %v1299 = vmul.f32 %v1298, 1.442695
    %v1300 = vpow.pop %v1299
    %v1301 = vadd.f32 %v1300, 1.0
    %v1302 = vrcp.pop %v1301
    %v1303 = vmul.f32 1.0, %v1302
    %v1304 = vmul.f32 %v1296, %v1188
    %v1305 = vmul.f32 %v1290, %v1297
    %v1306 = vadd.f32 %v1304, %v1305
    %v1307 = vtanh.pop %v1306
    %v1308 = vmul.f32 %v1303, %v1307
    %s1309 = scalar_lea.vmem [#allocation2], 48
    %v1310 = vld [vmem:[%s1309] sm:$0xff]
    %v1311 = vld [vmem:[%s1309 + $0x8] sm:$0xff]
    %v1312 = vunpack.c.l.bf16 %v1310
    %v1313 = vunpack.c.h.bf16 %v1310
    %v1314 = vunpack.c.l.bf16 %v1311
    %v1315 = vunpack.c.h.bf16 %v1311
    %v1316 = vpack.c.bf16 %v1308, %v1308
    %1317 = vmatprep.subr.bf16.mxu0 %v928
    %1318 = vmatpush1.bf16.msra.mxu0 %v927
    %1319 = vmatprep.subr.bf16.mxu0 %v924
    %1320 = vmatpush1.bf16.msra.mxu0 %v923
    %1321 = vmatprep.subr.bf16.mxu0 %v920
    %1322 = vmatpush1.bf16.msra.mxu0 %v919
    %1323 = vmatprep.subr.bf16.mxu0 %v916
    %1324 = vmatpush1.bf16.msra.mxu0 %v915
    %1325 = vmatprep.subr.bf16.mxu0 %v912
    %1326 = vmatpush1.bf16.msra.mxu0 %v911
    %1327 = vmatprep.subr.bf16.mxu0 %v908
    %1328 = vmatpush1.bf16.msra.mxu0 %v907
    %1329 = vmatprep.subr.bf16.mxu0 %v904
    %1330 = vmatpush1.bf16.msra.mxu0 %v903
    %1331 = vmatprep.subr.bf16.mxu0 %v900
    %1332 = vmatpush1.bf16.msra.mxu0 %v899
    %1333 = vmatprep.subr.bf16.mxu0 0
    %1334 = vmatpush2.bf16.msra.mxu0 0
    %1335 = vmatprep.subr.bf16.mxu0 0
    %1336 = vmatpush2.bf16.msra.mxu0 0
    %1337 = vmatprep.subr.bf16.mxu0 0
    %1338 = vmatpush2.bf16.msra.mxu0 0
    %1339 = vmatprep.subr.bf16.mxu0 0
    %1340 = vmatpush2.bf16.msra.mxu0 0
    %1341 = vmatprep.subr.bf16.mxu0 0
    %1342 = vmatpush2.bf16.msra.mxu0 0
    %1343 = vmatprep.subr.bf16.mxu0 0
    %1344 = vmatpush2.bf16.msra.mxu0 0
    %1345 = vmatprep.subr.bf16.mxu0 0
    %1346 = vmatpush2.bf16.msra.mxu0 0
    %1347 = vmatprep.subr.bf16.mxu0 0
    %1348 = vmatpush2.bf16.msra.mxu0 0
    %1349 = vmatprep.mubr.bf16.mxu0 0
    %1350 = vmatmul.mubr.bf16.gmra.mxu0 %v1316
    %v1351 = vpop.f32.mrf.mxu0
    %v1352 = vadd.f32 0.0, %v1351
    %v1353 = vpop.f32.mrf.mxu0
    %v1354 = vadd.f32 0.0, %v1353
    %v1355 = vpop.f32.mrf.mxu0
    %v1356 = vpop.f32.mrf.mxu0
    %1357 = vdwg.mxu0
    %1358 = vmatprep.subr.bf16.mxu0 %v930
    %1359 = vmatpush1.bf16.msra.mxu0 %v929
    %1360 = vmatprep.subr.bf16.mxu0 %v926
    %1361 = vmatpush1.bf16.msra.mxu0 %v925
    %1362 = vmatprep.subr.bf16.mxu0 %v922
    %1363 = vmatpush1.bf16.msra.mxu0 %v921
    %1364 = vmatprep.subr.bf16.mxu0 %v918
    %1365 = vmatpush1.bf16.msra.mxu0 %v917
    %1366 = vmatprep.subr.bf16.mxu0 %v914
    %1367 = vmatpush1.bf16.msra.mxu0 %v913
    %1368 = vmatprep.subr.bf16.mxu0 %v910
    %1369 = vmatpush1.bf16.msra.mxu0 %v909
    %1370 = vmatprep.subr.bf16.mxu0 %v906
    %1371 = vmatpush1.bf16.msra.mxu0 %v905
    %1372 = vmatprep.subr.bf16.mxu0 %v902
    %1373 = vmatpush1.bf16.msra.mxu0 %v901
    %1374 = vmatprep.subr.bf16.mxu0 0
    %1375 = vmatpush2.bf16.msra.mxu0 0
    %1376 = vmatprep.subr.bf16.mxu0 0
    %1377 = vmatpush2.bf16.msra.mxu0 0
    %1378 = vmatprep.subr.bf16.mxu0 0
    %1379 = vmatpush2.bf16.msra.mxu0 0
    %1380 = vmatprep.subr.bf16.mxu0 0
    %1381 = vmatpush2.bf16.msra.mxu0 0
    %1382 = vmatprep.subr.bf16.mxu0 0
    %1383 = vmatpush2.bf16.msra.mxu0 0
    %1384 = vmatprep.subr.bf16.mxu0 0
    %1385 = vmatpush2.bf16.msra.mxu0 0
    %1386 = vmatprep.subr.bf16.mxu0 0
    %1387 = vmatpush2.bf16.msra.mxu0 0
    %1388 = vmatprep.subr.bf16.mxu0 0
    %1389 = vmatpush2.bf16.msra.mxu0 0
    %1390 = vmatprep.mubr.bf16.mxu0 0
    %1391 = vmatmul.mubr.bf16.gmra.mxu0 %v1316
    %v1392 = vpop.f32.mrf.mxu0
    %v1393 = vadd.f32 0.0, %v1392
    %v1394 = vpop.f32.mrf.mxu0
    %v1395 = vadd.f32 0.0, %v1394
    %v1396 = vpop.f32.mrf.mxu0
    %v1397 = vpop.f32.mrf.mxu0
    %1398 = vdwg.mxu0
    %v1399 = vadd.f32 %v1312, %v1352
    %v1400 = vadd.f32 %v1313, %v1354
    %v1401 = vadd.f32 %v1314, %v1393
    %v1402 = vadd.f32 %v1315, %v1395
    %v1403 = vxor.u32 %v1399, 2147483648
    %v1404 = vmul.f32 %v1403, 1.442695
    %v1405 = vpow.pop %v1404
    %v1406 = vadd.f32 %v1405, 1.0
    %v1407 = vrcp.pop %v1406
    %v1408 = vmul.f32 1.0, %v1407
    %v1409 = vxor.u32 %v1400, 2147483648
    %v1410 = vmul.f32 %v1409, 1.442695
    %v1411 = vpow.pop %v1410
    %v1412 = vadd.f32 %v1411, 1.0
    %v1413 = vrcp.pop %v1412
    %v1414 = vmul.f32 1.0, %v1413
    %v1415 = vtanh.pop %v1401
    %v1416 = vxor.u32 %v1402, 2147483648
    %v1417 = vmul.f32 %v1416, 1.442695
    %v1418 = vpow.pop %v1417
    %v1419 = vadd.f32 %v1418, 1.0
    %v1420 = vrcp.pop %v1419
    %v1421 = vmul.f32 1.0, %v1420
    %v1422 = vmul.f32 %v1414, %v1306
    %v1423 = vmul.f32 %v1408, %v1415
    %v1424 = vadd.f32 %v1422, %v1423
    %v1425 = vtanh.pop %v1424
    %v1426 = vmul.f32 %v1421, %v1425
    %s1427 = scalar_lea.vmem [#allocation2], 64
    %v1428 = vld [vmem:[%s1427] sm:$0xff]
    %v1429 = vld [vmem:[%s1427 + $0x8] sm:$0xff]
    %v1430 = vunpack.c.l.bf16 %v1428
    %v1431 = vunpack.c.h.bf16 %v1428
    %v1432 = vunpack.c.l.bf16 %v1429
    %v1433 = vunpack.c.h.bf16 %v1429
    %v1434 = vpack.c.bf16 %v1426, %v1426
    %1435 = vmatprep.subr.bf16.mxu0 %v928
    %1436 = vmatpush1.bf16.msra.mxu0 %v927
    %1437 = vmatprep.subr.bf16.mxu0 %v924
    %1438 = vmatpush1.bf16.msra.mxu0 %v923
    %1439 = vmatprep.subr.bf16.mxu0 %v920
    %1440 = vmatpush1.bf16.msra.mxu0 %v919
    %1441 = vmatprep.subr.bf16.mxu0 %v916
    %1442 = vmatpush1.bf16.msra.mxu0 %v915
    %1443 = vmatprep.subr.bf16.mxu0 %v912
    %1444 = vmatpush1.bf16.msra.mxu0 %v911
    %1445 = vmatprep.subr.bf16.mxu0 %v908
    %1446 = vmatpush1.bf16.msra.mxu0 %v907
    %1447 = vmatprep.subr.bf16.mxu0 %v904
    %1448 = vmatpush1.bf16.msra.mxu0 %v903
    %1449 = vmatprep.subr.bf16.mxu0 %v900
    %1450 = vmatpush1.bf16.msra.mxu0 %v899
    %1451 = vmatprep.subr.bf16.mxu0 0
    %1452 = vmatpush2.bf16.msra.mxu0 0
    %1453 = vmatprep.subr.bf16.mxu0 0
    %1454 = vmatpush2.bf16.msra.mxu0 0
    %1455 = vmatprep.subr.bf16.mxu0 0
    %1456 = vmatpush2.bf16.msra.mxu0 0
    %1457 = vmatprep.subr.bf16.mxu0 0
    %1458 = vmatpush2.bf16.msra.mxu0 0
    %1459 = vmatprep.subr.bf16.mxu0 0
    %1460 = vmatpush2.bf16.msra.mxu0 0
    %1461 = vmatprep.subr.bf16.mxu0 0
    %1462 = vmatpush2.bf16.msra.mxu0 0
    %1463 = vmatprep.subr.bf16.mxu0 0
    %1464 = vmatpush2.bf16.msra.mxu0 0
    %1465 = vmatprep.subr.bf16.mxu0 0
    %1466 = vmatpush2.bf16.msra.mxu0 0
    %1467 = vmatprep.mubr.bf16.mxu0 0
    %1468 = vmatmul.mubr.bf16.gmra.mxu0 %v1434
    %v1469 = vpop.f32.mrf.mxu0
    %v1470 = vadd.f32 0.0, %v1469
    %v1471 = vpop.f32.mrf.mxu0
    %v1472 = vadd.f32 0.0, %v1471
    %v1473 = vpop.f32.mrf.mxu0
    %v1474 = vpop.f32.mrf.mxu0
    %1475 = vdwg.mxu0
    %1476 = vmatprep.subr.bf16.mxu0 %v930
    %1477 = vmatpush1.bf16.msra.mxu0 %v929
    %1478 = vmatprep.subr.bf16.mxu0 %v926
    %1479 = vmatpush1.bf16.msra.mxu0 %v925
    %1480 = vmatprep.subr.bf16.mxu0 %v922
    %1481 = vmatpush1.bf16.msra.mxu0 %v921
    %1482 = vmatprep.subr.bf16.mxu0 %v918
    %1483 = vmatpush1.bf16.msra.mxu0 %v917
    %1484 = vmatprep.subr.bf16.mxu0 %v914
    %1485 = vmatpush1.bf16.msra.mxu0 %v913
    %1486 = vmatprep.subr.bf16.mxu0 %v910
    %1487 = vmatpush1.bf16.msra.mxu0 %v909
    %1488 = vmatprep.subr.bf16.mxu0 %v906
    %1489 = vmatpush1.bf16.msra.mxu0 %v905
    %1490 = vmatprep.subr.bf16.mxu0 %v902
    %1491 = vmatpush1.bf16.msra.mxu0 %v901
    %1492 = vmatprep.subr.bf16.mxu0 0
    %1493 = vmatpush2.bf16.msra.mxu0 0
    %1494 = vmatprep.subr.bf16.mxu0 0
    %1495 = vmatpush2.bf16.msra.mxu0 0
    %1496 = vmatprep.subr.bf16.mxu0 0
    %1497 = vmatpush2.bf16.msra.mxu0 0
    %1498 = vmatprep.subr.bf16.mxu0 0
    %1499 = vmatpush2.bf16.msra.mxu0 0
    %1500 = vmatprep.subr.bf16.mxu0 0
    %1501 = vmatpush2.bf16.msra.mxu0 0
    %1502 = vmatprep.subr.bf16.mxu0 0
    %1503 = vmatpush2.bf16.msra.mxu0 0
    %1504 = vmatprep.subr.bf16.mxu0 0
    %1505 = vmatpush2.bf16.msra.mxu0 0
    %1506 = vmatprep.subr.bf16.mxu0 0
    %1507 = vmatpush2.bf16.msra.mxu0 0
    %1508 = vmatprep.mubr.bf16.mxu0 0
    %1509 = vmatmul.mubr.bf16.gmra.mxu0 %v1434
    %v1510 = vpop.f32.mrf.mxu0
    %v1511 = vadd.f32 0.0, %v1510
    %v1512 = vpop.f32.mrf.mxu0
    %v1513 = vadd.f32 0.0, %v1512
    %v1514 = vpop.f32.mrf.mxu0
    %v1515 = vpop.f32.mrf.mxu0
    %1516 = vdwg.mxu0
    %v1517 = vadd.f32 %v1430, %v1470
    %v1518 = vadd.f32 %v1431, %v1472
    %v1519 = vadd.f32 %v1432, %v1511
    %v1520 = vadd.f32 %v1433, %v1513
    %v1521 = vxor.u32 %v1517, 2147483648
    %v1522 = vmul.f32 %v1521, 1.442695
    %v1523 = vpow.pop %v1522
    %v1524 = vadd.f32 %v1523, 1.0
    %v1525 = vrcp.pop %v1524
    %v1526 = vmul.f32 1.0, %v1525
    %v1527 = vxor.u32 %v1518, 2147483648
    %v1528 = vmul.f32 %v1527, 1.442695
    %v1529 = vpow.pop %v1528
    %v1530 = vadd.f32 %v1529, 1.0
    %v1531 = vrcp.pop %v1530
    %v1532 = vmul.f32 1.0, %v1531
    %v1533 = vtanh.pop %v1519
    %v1534 = vxor.u32 %v1520, 2147483648
    %v1535 = vmul.f32 %v1534, 1.442695
    %v1536 = vpow.pop %v1535
    %v1537 = vadd.f32 %v1536, 1.0
    %v1538 = vrcp.pop %v1537
    %v1539 = vmul.f32 1.0, %v1538
    %v1540 = vmul.f32 %v1532, %v1424
    %v1541 = vmul.f32 %v1526, %v1533
    %v1542 = vadd.f32 %v1540, %v1541
    %v1543 = vtanh.pop %v1542
    %v1544 = vmul.f32 %v1539, %v1543
    %s1545 = scalar_lea.vmem [#allocation2], 80
    %v1546 = vld [vmem:[%s1545] sm:$0xff]
    %v1547 = vld [vmem:[%s1545 + $0x8] sm:$0xff]
    %v1548 = vunpack.c.l.bf16 %v1546
    %v1549 = vunpack.c.h.bf16 %v1546
    %v1550 = vunpack.c.l.bf16 %v1547
    %v1551 = vunpack.c.h.bf16 %v1547
    %v1552 = vpack.c.bf16 %v1544, %v1544
    %1553 = vmatprep.subr.bf16.mxu0 %v928
    %1554 = vmatpush1.bf16.msra.mxu0 %v927
    %1555 = vmatprep.subr.bf16.mxu0 %v924
    %1556 = vmatpush1.bf16.msra.mxu0 %v923
    %1557 = vmatprep.subr.bf16.mxu0 %v920
    %1558 = vmatpush1.bf16.msra.mxu0 %v919
    %1559 = vmatprep.subr.bf16.mxu0 %v916
    %1560 = vmatpush1.bf16.msra.mxu0 %v915
    %1561 = vmatprep.subr.bf16.mxu0 %v912
    %1562 = vmatpush1.bf16.msra.mxu0 %v911
    %1563 = vmatprep.subr.bf16.mxu0 %v908
    %1564 = vmatpush1.bf16.msra.mxu0 %v907
    %1565 = vmatprep.subr.bf16.mxu0 %v904
    %1566 = vmatpush1.bf16.msra.mxu0 %v903
    %1567 = vmatprep.subr.bf16.mxu0 %v900
    %1568 = vmatpush1.bf16.msra.mxu0 %v899
    %1569 = vmatprep.subr.bf16.mxu0 0
    %1570 = vmatpush2.bf16.msra.mxu0 0
    %1571 = vmatprep.subr.bf16.mxu0 0
    %1572 = vmatpush2.bf16.msra.mxu0 0
    %1573 = vmatprep.subr.bf16.mxu0 0
    %1574 = vmatpush2.bf16.msra.mxu0 0
    %1575 = vmatprep.subr.bf16.mxu0 0
    %1576 = vmatpush2.bf16.msra.mxu0 0
    %1577 = vmatprep.subr.bf16.mxu0 0
    %1578 = vmatpush2.bf16.msra.mxu0 0
    %1579 = vmatprep.subr.bf16.mxu0 0
    %1580 = vmatpush2.bf16.msra.mxu0 0
    %1581 = vmatprep.subr.bf16.mxu0 0
    %1582 = vmatpush2.bf16.msra.mxu0 0
    %1583 = vmatprep.subr.bf16.mxu0 0
    %1584 = vmatpush2.bf16.msra.mxu0 0
    %1585 = vmatprep.mubr.bf16.mxu0 0
    %1586 = vmatmul.mubr.bf16.gmra.mxu0 %v1552
    %v1587 = vpop.f32.mrf.mxu0
    %v1588 = vadd.f32 0.0, %v1587
    %v1589 = vpop.f32.mrf.mxu0
    %v1590 = vadd.f32 0.0, %v1589
    %v1591 = vpop.f32.mrf.mxu0
    %v1592 = vpop.f32.mrf.mxu0
    %1593 = vdwg.mxu0
    %1594 = vmatprep.subr.bf16.mxu0 %v930
    %1595 = vmatpush1.bf16.msra.mxu0 %v929
    %1596 = vmatprep.subr.bf16.mxu0 %v926
    %1597 = vmatpush1.bf16.msra.mxu0 %v925
    %1598 = vmatprep.subr.bf16.mxu0 %v922
    %1599 = vmatpush1.bf16.msra.mxu0 %v921
    %1600 = vmatprep.subr.bf16.mxu0 %v918
    %1601 = vmatpush1.bf16.msra.mxu0 %v917
    %1602 = vmatprep.subr.bf16.mxu0 %v914
    %1603 = vmatpush1.bf16.msra.mxu0 %v913
    %1604 = vmatprep.subr.bf16.mxu0 %v910
    %1605 = vmatpush1.bf16.msra.mxu0 %v909
    %1606 = vmatprep.subr.bf16.mxu0 %v906
    %1607 = vmatpush1.bf16.msra.mxu0 %v905
    %1608 = vmatprep.subr.bf16.mxu0 %v902
    %1609 = vmatpush1.bf16.msra.mxu0 %v901
    %1610 = vmatprep.subr.bf16.mxu0 0
    %1611 = vmatpush2.bf16.msra.mxu0 0
    %1612 = vmatprep.subr.bf16.mxu0 0
    %1613 = vmatpush2.bf16.msra.mxu0 0
    %1614 = vmatprep.subr.bf16.mxu0 0
    %1615 = vmatpush2.bf16.msra.mxu0 0
    %1616 = vmatprep.subr.bf16.mxu0 0
    %1617 = vmatpush2.bf16.msra.mxu0 0
    %1618 = vmatprep.subr.bf16.mxu0 0
    %1619 = vmatpush2.bf16.msra.mxu0 0
    %1620 = vmatprep.subr.bf16.mxu0 0
    %1621 = vmatpush2.bf16.msra.mxu0 0
    %1622 = vmatprep.subr.bf16.mxu0 0
    %1623 = vmatpush2.bf16.msra.mxu0 0
    %1624 = vmatprep.subr.bf16.mxu0 0
    %1625 = vmatpush2.bf16.msra.mxu0 0
    %1626 = vmatprep.mubr.bf16.mxu0 0
    %1627 = vmatmul.mubr.bf16.gmra.mxu0 %v1552
    %v1628 = vpop.f32.mrf.mxu0
    %v1629 = vadd.f32 0.0, %v1628
    %v1630 = vpop.f32.mrf.mxu0
    %v1631 = vadd.f32 0.0, %v1630
    %v1632 = vpop.f32.mrf.mxu0
    %v1633 = vpop.f32.mrf.mxu0
    %1634 = vdwg.mxu0
    %v1635 = vadd.f32 %v1548, %v1588
    %v1636 = vadd.f32 %v1549, %v1590
    %v1637 = vadd.f32 %v1550, %v1629
    %v1638 = vadd.f32 %v1551, %v1631
    %v1639 = vxor.u32 %v1635, 2147483648
    %v1640 = vmul.f32 %v1639, 1.442695
    %v1641 = vpow.pop %v1640
    %v1642 = vadd.f32 %v1641, 1.0
    %v1643 = vrcp.pop %v1642
    %v1644 = vmul.f32 1.0, %v1643
    %v1645 = vxor.u32 %v1636, 2147483648
    %v1646 = vmul.f32 %v1645, 1.442695
    %v1647 = vpow.pop %v1646
    %v1648 = vadd.f32 %v1647, 1.0
    %v1649 = vrcp.pop %v1648
    %v1650 = vmul.f32 1.0, %v1649
    %v1651 = vtanh.pop %v1637
    %v1652 = vxor.u32 %v1638, 2147483648
    %v1653 = vmul.f32 %v1652, 1.442695
    %v1654 = vpow.pop %v1653
    %v1655 = vadd.f32 %v1654, 1.0
    %v1656 = vrcp.pop %v1655
    %v1657 = vmul.f32 1.0, %v1656
    %v1658 = vmul.f32 %v1650, %v1542
    %v1659 = vmul.f32 %v1644, %v1651
    %v1660 = vadd.f32 %v1658, %v1659
    %v1661 = vtanh.pop %v1660
    %v1662 = vmul.f32 %v1657, %v1661
    %s1663 = scalar_lea.vmem [#allocation2], 96
    %v1664 = vld [vmem:[%s1663] sm:$0xff]
    %v1665 = vld [vmem:[%s1663 + $0x8] sm:$0xff]
    %v1666 = vunpack.c.l.bf16 %v1664
    %v1667 = vunpack.c.h.bf16 %v1664
    %v1668 = vunpack.c.l.bf16 %v1665
    %v1669 = vunpack.c.h.bf16 %v1665
    %v1670 = vpack.c.bf16 %v1662, %v1662
    %1671 = vmatprep.subr.bf16.mxu0 %v928
    %1672 = vmatpush1.bf16.msra.mxu0 %v927
    %1673 = vmatprep.subr.bf16.mxu0 %v924
    %1674 = vmatpush1.bf16.msra.mxu0 %v923
    %1675 = vmatprep.subr.bf16.mxu0 %v920
    %1676 = vmatpush1.bf16.msra.mxu0 %v919
    %1677 = vmatprep.subr.bf16.mxu0 %v916
    %1678 = vmatpush1.bf16.msra.mxu0 %v915
    %1679 = vmatprep.subr.bf16.mxu0 %v912
    %1680 = vmatpush1.bf16.msra.mxu0 %v911
    %1681 = vmatprep.subr.bf16.mxu0 %v908
    %1682 = vmatpush1.bf16.msra.mxu0 %v907
    %1683 = vmatprep.subr.bf16.mxu0 %v904
    %1684 = vmatpush1.bf16.msra.mxu0 %v903
    %1685 = vmatprep.subr.bf16.mxu0 %v900
    %1686 = vmatpush1.bf16.msra.mxu0 %v899
    %1687 = vmatprep.subr.bf16.mxu0 0
    %1688 = vmatpush2.bf16.msra.mxu0 0
    %1689 = vmatprep.subr.bf16.mxu0 0
    %1690 = vmatpush2.bf16.msra.mxu0 0
    %1691 = vmatprep.subr.bf16.mxu0 0
    %1692 = vmatpush2.bf16.msra.mxu0 0
    %1693 = vmatprep.subr.bf16.mxu0 0
    %1694 = vmatpush2.bf16.msra.mxu0 0
    %1695 = vmatprep.subr.bf16.mxu0 0
    %1696 = vmatpush2.bf16.msra.mxu0 0
    %1697 = vmatprep.subr.bf16.mxu0 0
    %1698 = vmatpush2.bf16.msra.mxu0 0
    %1699 = vmatprep.subr.bf16.mxu0 0
    %1700 = vmatpush2.bf16.msra.mxu0 0
    %1701 = vmatprep.subr.bf16.mxu0 0
    %1702 = vmatpush2.bf16.msra.mxu0 0
    %1703 = vmatprep.mubr.bf16.mxu0 0
    %1704 = vmatmul.mubr.bf16.gmra.mxu0 %v1670
    %v1705 = vpop.f32.mrf.mxu0
    %v1706 = vadd.f32 0.0, %v1705
    %v1707 = vpop.f32.mrf.mxu0
    %v1708 = vadd.f32 0.0, %v1707
    %v1709 = vpop.f32.mrf.mxu0
    %v1710 = vpop.f32.mrf.mxu0
    %1711 = vdwg.mxu0
    %1712 = vmatprep.subr.bf16.mxu0 %v930
    %1713 = vmatpush1.bf16.msra.mxu0 %v929
    %1714 = vmatprep.subr.bf16.mxu0 %v926
    %1715 = vmatpush1.bf16.msra.mxu0 %v925
    %1716 = vmatprep.subr.bf16.mxu0 %v922
    %1717 = vmatpush1.bf16.msra.mxu0 %v921
    %1718 = vmatprep.subr.bf16.mxu0 %v918
    %1719 = vmatpush1.bf16.msra.mxu0 %v917
    %1720 = vmatprep.subr.bf16.mxu0 %v914
    %1721 = vmatpush1.bf16.msra.mxu0 %v913
    %1722 = vmatprep.subr.bf16.mxu0 %v910
    %1723 = vmatpush1.bf16.msra.mxu0 %v909
    %1724 = vmatprep.subr.bf16.mxu0 %v906
    %1725 = vmatpush1.bf16.msra.mxu0 %v905
    %1726 = vmatprep.subr.bf16.mxu0 %v902
    %1727 = vmatpush1.bf16.msra.mxu0 %v901
    %1728 = vmatprep.subr.bf16.mxu0 0
    %1729 = vmatpush2.bf16.msra.mxu0 0
    %1730 = vmatprep.subr.bf16.mxu0 0
    %1731 = vmatpush2.bf16.msra.mxu0 0
    %1732 = vmatprep.subr.bf16.mxu0 0
    %1733 = vmatpush2.bf16.msra.mxu0 0
    %1734 = vmatprep.subr.bf16.mxu0 0
    %1735 = vmatpush2.bf16.msra.mxu0 0
    %1736 = vmatprep.subr.bf16.mxu0 0
    %1737 = vmatpush2.bf16.msra.mxu0 0
    %1738 = vmatprep.subr.bf16.mxu0 0
    %1739 = vmatpush2.bf16.msra.mxu0 0
    %1740 = vmatprep.subr.bf16.mxu0 0
    %1741 = vmatpush2.bf16.msra.mxu0 0
    %1742 = vmatprep.subr.bf16.mxu0 0
    %1743 = vmatpush2.bf16.msra.mxu0 0
    %1744 = vmatprep.mubr.bf16.mxu0 0
    %1745 = vmatmul.mubr.bf16.gmra.mxu0 %v1670
    %v1746 = vpop.f32.mrf.mxu0
    %v1747 = vadd.f32 0.0, %v1746
    %v1748 = vpop.f32.mrf.mxu0
    %v1749 = vadd.f32 0.0, %v1748
    %v1750 = vpop.f32.mrf.mxu0
    %v1751 = vpop.f32.mrf.mxu0
    %1752 = vdwg.mxu0
    %v1753 = vadd.f32 %v1666, %v1706
    %v1754 = vadd.f32 %v1667, %v1708
    %v1755 = vadd.f32 %v1668, %v1747
    %v1756 = vadd.f32 %v1669, %v1749
    %v1757 = vxor.u32 %v1753, 2147483648
    %v1758 = vmul.f32 %v1757, 1.442695
    %v1759 = vpow.pop %v1758
    %v1760 = vadd.f32 %v1759, 1.0
    %v1761 = vrcp.pop %v1760
    %v1762 = vmul.f32 1.0, %v1761
    %v1763 = vxor.u32 %v1754, 2147483648
    %v1764 = vmul.f32 %v1763, 1.442695
    %v1765 = vpow.pop %v1764
    %v1766 = vadd.f32 %v1765, 1.0
    %v1767 = vrcp.pop %v1766
    %v1768 = vmul.f32 1.0, %v1767
    %v1769 = vtanh.pop %v1755
    %v1770 = vxor.u32 %v1756, 2147483648
    %v1771 = vmul.f32 %v1770, 1.442695
    %v1772 = vpow.pop %v1771
    %v1773 = vadd.f32 %v1772, 1.0
    %v1774 = vrcp.pop %v1773
    %v1775 = vmul.f32 1.0, %v1774
    %v1776 = vmul.f32 %v1768, %v1660
    %v1777 = vmul.f32 %v1762, %v1769
    %v1778 = vadd.f32 %v1776, %v1777
    %v1779 = vtanh.pop %v1778
    %v1780 = vmul.f32 %v1775, %v1779
    %s1781 = scalar_lea.vmem [#allocation2], 112
    %v1782 = vld [vmem:[%s1781] sm:$0xff]
    %v1783 = vld [vmem:[%s1781 + $0x8] sm:$0xff]
    %v1784 = vunpack.c.l.bf16 %v1782
    %v1785 = vunpack.c.h.bf16 %v1782
    %v1786 = vunpack.c.l.bf16 %v1783
    %v1787 = vunpack.c.h.bf16 %v1783
    %v1788 = vpack.c.bf16 %v1780, %v1780
    %1789 = vmatprep.subr.bf16.mxu0 %v928
    %1790 = vmatpush1.bf16.msra.mxu0 %v927
    %1791 = vmatprep.subr.bf16.mxu0 %v924
    %1792 = vmatpush1.bf16.msra.mxu0 %v923
    %1793 = vmatprep.subr.bf16.mxu0 %v920
    %1794 = vmatpush1.bf16.msra.mxu0 %v919
    %1795 = vmatprep.subr.bf16.mxu0 %v916
    %1796 = vmatpush1.bf16.msra.mxu0 %v915
    %1797 = vmatprep.subr.bf16.mxu0 %v912
    %1798 = vmatpush1.bf16.msra.mxu0 %v911
    %1799 = vmatprep.subr.bf16.mxu0 %v908
    %1800 = vmatpush1.bf16.msra.mxu0 %v907
    %1801 = vmatprep.subr.bf16.mxu0 %v904
    %1802 = vmatpush1.bf16.msra.mxu0 %v903
    %1803 = vmatprep.subr.bf16.mxu0 %v900
    %1804 = vmatpush1.bf16.msra.mxu0 %v899
    %1805 = vmatprep.subr.bf16.mxu0 0
    %1806 = vmatpush2.bf16.msra.mxu0 0
    %1807 = vmatprep.subr.bf16.mxu0 0
    %1808 = vmatpush2.bf16.msra.mxu0 0
    %1809 = vmatprep.subr.bf16.mxu0 0
    %1810 = vmatpush2.bf16.msra.mxu0 0
    %1811 = vmatprep.subr.bf16.mxu0 0
    %1812 = vmatpush2.bf16.msra.mxu0 0
    %1813 = vmatprep.subr.bf16.mxu0 0
    %1814 = vmatpush2.bf16.msra.mxu0 0
    %1815 = vmatprep.subr.bf16.mxu0 0
    %1816 = vmatpush2.bf16.msra.mxu0 0
    %1817 = vmatprep.subr.bf16.mxu0 0
    %1818 = vmatpush2.bf16.msra.mxu0 0
    %1819 = vmatprep.subr.bf16.mxu0 0
    %1820 = vmatpush2.bf16.msra.mxu0 0
    %1821 = vmatprep.mubr.bf16.mxu0 0
    %1822 = vmatmul.mubr.bf16.gmra.mxu0 %v1788
    %v1823 = vpop.f32.mrf.mxu0
    %v1824 = vadd.f32 0.0, %v1823
    %v1825 = vpop.f32.mrf.mxu0
    %v1826 = vadd.f32 0.0, %v1825
    %v1827 = vpop.f32.mrf.mxu0
    %v1828 = vpop.f32.mrf.mxu0
    %1829 = vdwg.mxu0
    %1830 = vmatprep.subr.bf16.mxu0 %v930
    %1831 = vmatpush1.bf16.msra.mxu0 %v929
    %1832 = vmatprep.subr.bf16.mxu0 %v926
    %1833 = vmatpush1.bf16.msra.mxu0 %v925
    %1834 = vmatprep.subr.bf16.mxu0 %v922
    %1835 = vmatpush1.bf16.msra.mxu0 %v921
    %1836 = vmatprep.subr.bf16.mxu0 %v918
    %1837 = vmatpush1.bf16.msra.mxu0 %v917
    %1838 = vmatprep.subr.bf16.mxu0 %v914
    %1839 = vmatpush1.bf16.msra.mxu0 %v913
    %1840 = vmatprep.subr.bf16.mxu0 %v910
    %1841 = vmatpush1.bf16.msra.mxu0 %v909
    %1842 = vmatprep.subr.bf16.mxu0 %v906
    %1843 = vmatpush1.bf16.msra.mxu0 %v905
    %1844 = vmatprep.subr.bf16.mxu0 %v902
    %1845 = vmatpush1.bf16.msra.mxu0 %v901
    %1846 = vmatprep.subr.bf16.mxu0 0
    %1847 = vmatpush2.bf16.msra.mxu0 0
    %1848 = vmatprep.subr.bf16.mxu0 0
    %1849 = vmatpush2.bf16.msra.mxu0 0
    %1850 = vmatprep.subr.bf16.mxu0 0
    %1851 = vmatpush2.bf16.msra.mxu0 0
    %1852 = vmatprep.subr.bf16.mxu0 0
    %1853 = vmatpush2.bf16.msra.mxu0 0
    %1854 = vmatprep.subr.bf16.mxu0 0
    %1855 = vmatpush2.bf16.msra.mxu0 0
    %1856 = vmatprep.subr.bf16.mxu0 0
    %1857 = vmatpush2.bf16.msra.mxu0 0
    %1858 = vmatprep.subr.bf16.mxu0 0
    %1859 = vmatpush2.bf16.msra.mxu0 0
    %1860 = vmatprep.subr.bf16.mxu0 0
    %1861 = vmatpush2.bf16.msra.mxu0 0
    %1862 = vmatprep.mubr.bf16.mxu0 0
    %1863 = vmatmul.mubr.bf16.gmra.mxu0 %v1788
    %v1864 = vpop.f32.mrf.mxu0
    %v1865 = vadd.f32 0.0, %v1864
    %v1866 = vpop.f32.mrf.mxu0
    %v1867 = vadd.f32 0.0, %v1866
    %v1868 = vpop.f32.mrf.mxu0
    %v1869 = vpop.f32.mrf.mxu0
    %1870 = vdwg.mxu0
    %v1871 = vadd.f32 %v1784, %v1824
    %v1872 = vadd.f32 %v1785, %v1826
    %v1873 = vadd.f32 %v1786, %v1865
    %v1874 = vadd.f32 %v1787, %v1867
    %v1875 = vxor.u32 %v1871, 2147483648
    %v1876 = vmul.f32 %v1875, 1.442695
    %v1877 = vpow.pop %v1876
    %v1878 = vadd.f32 %v1877, 1.0
    %v1879 = vrcp.pop %v1878
    %v1880 = vmul.f32 1.0, %v1879
    %v1881 = vxor.u32 %v1872, 2147483648
    %v1882 = vmul.f32 %v1881, 1.442695
    %v1883 = vpow.pop %v1882
    %v1884 = vadd.f32 %v1883, 1.0
    %v1885 = vrcp.pop %v1884
    %v1886 = vmul.f32 1.0, %v1885
    %v1887 = vtanh.pop %v1873
    %v1888 = vxor.u32 %v1874, 2147483648
    %v1889 = vmul.f32 %v1888, 1.442695
    %v1890 = vpow.pop %v1889
    %v1891 = vadd.f32 %v1890, 1.0
    %v1892 = vrcp.pop %v1891
    %v1893 = vmul.f32 1.0, %v1892
    %v1894 = vmul.f32 %v1886, %v1778
    %v1895 = vmul.f32 %v1880, %v1887
    %v1896 = vadd.f32 %v1894, %v1895
    %v1897 = vtanh.pop %v1896
    %v1898 = vmul.f32 %v1893, %v1897
    %v1899 = vpack.c.bf16 %v1898, %v1898
    %v1900 = vld [vmem:[#allocation11] sm:$0xf]
    %v1901 = vld [vmem:[#allocation11 + $0x4] sm:$0xf]
    %v1902 = vld [vmem:[#allocation11 + $0x8] sm:$0xf]
    %v1903 = vld [vmem:[#allocation11 + $0xc] sm:$0xf]
    %v1904 = vld [vmem:[#allocation11 + $0x10] sm:$0xf]
    %v1905 = vld [vmem:[#allocation11 + $0x14] sm:$0xf]
    %v1906 = vld [vmem:[#allocation11 + $0x18] sm:$0xf]
    %v1907 = vld [vmem:[#allocation11 + $0x1c] sm:$0xf]
    %v1908 = vld [vmem:[#allocation11 + $0x20] sm:$0xf]
    %v1909 = vld [vmem:[#allocation11 + $0x24] sm:$0xf]
    %v1910 = vld [vmem:[#allocation11 + $0x28] sm:$0xf]
    %v1911 = vld [vmem:[#allocation11 + $0x2c] sm:$0xf]
    %v1912 = vld [vmem:[#allocation11 + $0x30] sm:$0xf]
    %v1913 = vld [vmem:[#allocation11 + $0x34] sm:$0xf]
    %v1914 = vld [vmem:[#allocation11 + $0x38] sm:$0xf]
    %v1915 = vld [vmem:[#allocation11 + $0x3c] sm:$0xf]
    %v1916 = vld [vmem:[%s7] sm:$0x1]
    %v1918 = vlaneseq
    %v1919 = vshrl.u32 %v1918, 7
    %v1920 = vsub.s32 0, %v1919
    %v1921 = vrot.slane %v1916, %v1920
    %v1939 = vunpack.c.l.b16 %v1900
    %v1940 = vunpack.c.l.b16 %v1901
    %v1941 = vunpack.c.l.b16 %v1902
    %v1942 = vunpack.c.l.b16 %v1903
    %v1943 = vunpack.c.l.b16 %v1904
    %v1944 = vunpack.c.l.b16 %v1905
    %v1945 = vunpack.c.l.b16 %v1906
    %v1946 = vunpack.c.l.b16 %v1907
    %v1947 = vunpack.c.l.b16 %v1908
    %v1948 = vunpack.c.l.b16 %v1909
    %v1949 = vunpack.c.l.b16 %v1910
    %v1950 = vunpack.c.l.b16 %v1911
    %v1951 = vunpack.c.l.b16 %v1912
    %v1952 = vunpack.c.l.b16 %v1913
    %v1953 = vunpack.c.l.b16 %v1914
    %v1954 = vunpack.c.l.b16 %v1915
    %v1955 = vpack.c.b16 %v1940, %v1939
    %v1956 = vpack.c.b16 %v1942, %v1941
    %v1957 = vpack.c.b16 %v1944, %v1943
    %v1958 = vpack.c.b16 %v1946, %v1945
    %v1959 = vpack.c.b16 %v1948, %v1947
    %v1960 = vpack.c.b16 %v1950, %v1949
    %v1961 = vpack.c.b16 %v1952, %v1951
    %v1962 = vpack.c.b16 %v1954, %v1953
    %1971 = vmatprep.subr.bf16.mxu0 0
    %1972 = vmatpush1.bf16.msra.mxu0 %v1962
    %1973 = vmatprep.subr.bf16.mxu0 0
    %1974 = vmatpush1.bf16.msra.mxu0 %v1961
    %1975 = vmatprep.subr.bf16.mxu0 0
    %1976 = vmatpush1.bf16.msra.mxu0 %v1960
    %1977 = vmatprep.subr.bf16.mxu0 0
    %1978 = vmatpush1.bf16.msra.mxu0 %v1959
    %1979 = vmatprep.subr.bf16.mxu0 0
    %1980 = vmatpush1.bf16.msra.mxu0 %v1958
    %1981 = vmatprep.subr.bf16.mxu0 0
    %1982 = vmatpush1.bf16.msra.mxu0 %v1957
    %1983 = vmatprep.subr.bf16.mxu0 0
    %1984 = vmatpush1.bf16.msra.mxu0 %v1956
    %1985 = vmatprep.subr.bf16.mxu0 0
    %1986 = vmatpush1.bf16.msra.mxu0 %v1955
    %1987 = vmatprep.subr.bf16.mxu0 0
    %1988 = vmatpush2.bf16.msra.mxu0 0
    %1989 = vmatprep.subr.bf16.mxu0 0
    %1990 = vmatpush2.bf16.msra.mxu0 0
    %1991 = vmatprep.subr.bf16.mxu0 0
    %1992 = vmatpush2.bf16.msra.mxu0 0
    %1993 = vmatprep.subr.bf16.mxu0 0
    %1994 = vmatpush2.bf16.msra.mxu0 0
    %1995 = vmatprep.subr.bf16.mxu0 0
    %1996 = vmatpush2.bf16.msra.mxu0 0
    %1997 = vmatprep.subr.bf16.mxu0 0
    %1998 = vmatpush2.bf16.msra.mxu0 0
    %1999 = vmatprep.subr.bf16.mxu0 0
    %2000 = vmatpush2.bf16.msra.mxu0 0
    %2001 = vmatprep.subr.bf16.mxu0 0
    %2002 = vmatpush2.bf16.msra.mxu0 0
    %2003 = vmatprep.mubr.bf16.mxu0 0
    %2004 = vmatmul.mubr.bf16.gmra.mxu0 %v1899
    %v2005 = vpop.f32.mrf.mxu0
    %v2006 = vadd.f32 %v1921, %v2005
    %v2007 = vpop.f32.mrf.mxu0
    %v2008 = vpop.f32.mrf.mxu0
    %v2009 = vpop.f32.mrf.mxu0
    %2010 = vdwg.mxu0
    %v2011 = vmax.f32 %v2006, 0.0
    %v2012 = vpack.c.bf16 %v2011, %v2011
    %v2013 = vld [vmem:[#allocation12] sm:$0xf]
    %v2014 = vld [vmem:[#allocation12 + $0x4] sm:$0xf]
    %v2015 = vld [vmem:[#allocation12 + $0x8] sm:$0xf]
    %v2016 = vld [vmem:[#allocation12 + $0xc] sm:$0xf]
    %v2017 = vld [vmem:[#allocation12 + $0x10] sm:$0xf]
    %v2018 = vld [vmem:[#allocation12 + $0x14] sm:$0xf]
    %v2019 = vld [vmem:[#allocation12 + $0x18] sm:$0xf]
    %v2020 = vld [vmem:[#allocation12 + $0x1c] sm:$0xf]
    %v2021 = vld [vmem:[#allocation12 + $0x20] sm:$0xf]
    %v2022 = vld [vmem:[#allocation12 + $0x24] sm:$0xf]
    %v2023 = vld [vmem:[#allocation12 + $0x28] sm:$0xf]
    %v2024 = vld [vmem:[#allocation12 + $0x2c] sm:$0xf]
    %v2025 = vld [vmem:[#allocation12 + $0x30] sm:$0xf]
    %v2026 = vld [vmem:[#allocation12 + $0x34] sm:$0xf]
    %v2027 = vld [vmem:[#allocation12 + $0x38] sm:$0xf]
    %v2028 = vld [vmem:[#allocation12 + $0x3c] sm:$0xf]
    %v2029 = vld [vmem:[#allocation14] sm:$0x1]
    %v2031 = vlaneseq
    %v2032 = vshrl.u32 %v2031, 7
    %v2033 = vsub.s32 0, %v2032
    %v2034 = vrot.slane %v2029, %v2033
    %v2052 = vunpack.c.l.b16 %v2013
    %v2053 = vunpack.c.l.b16 %v2014
    %v2054 = vunpack.c.l.b16 %v2015
    %v2055 = vunpack.c.l.b16 %v2016
    %v2056 = vunpack.c.l.b16 %v2017
    %v2057 = vunpack.c.l.b16 %v2018
    %v2058 = vunpack.c.l.b16 %v2019
    %v2059 = vunpack.c.l.b16 %v2020
    %v2060 = vunpack.c.l.b16 %v2021
    %v2061 = vunpack.c.l.b16 %v2022
    %v2062 = vunpack.c.l.b16 %v2023
    %v2063 = vunpack.c.l.b16 %v2024
    %v2064 = vunpack.c.l.b16 %v2025
    %v2065 = vunpack.c.l.b16 %v2026
    %v2066 = vunpack.c.l.b16 %v2027
    %v2067 = vunpack.c.l.b16 %v2028
    %v2068 = vpack.c.b16 %v2053, %v2052
    %v2069 = vpack.c.b16 %v2055, %v2054
    %v2070 = vpack.c.b16 %v2057, %v2056
    %v2071 = vpack.c.b16 %v2059, %v2058
    %v2072 = vpack.c.b16 %v2061, %v2060
    %v2073 = vpack.c.b16 %v2063, %v2062
    %v2074 = vpack.c.b16 %v2065, %v2064
    %v2075 = vpack.c.b16 %v2067, %v2066
    %2084 = vmatprep.subr.bf16.mxu0 0
    %2085 = vmatpush1.bf16.msra.mxu0 %v2075
    %2086 = vmatprep.subr.bf16.mxu0 0
    %2087 = vmatpush1.bf16.msra.mxu0 %v2074
    %2088 = vmatprep.subr.bf16.mxu0 0
    %2089 = vmatpush1.bf16.msra.mxu0 %v2073
    %2090 = vmatprep.subr.bf16.mxu0 0
    %2091 = vmatpush1.bf16.msra.mxu0 %v2072
    %2092 = vmatprep.subr.bf16.mxu0 0
    %2093 = vmatpush1.bf16.msra.mxu0 %v2071
    %2094 = vmatprep.subr.bf16.mxu0 0
    %2095 = vmatpush1.bf16.msra.mxu0 %v2070
    %2096 = vmatprep.subr.bf16.mxu0 0
    %2097 = vmatpush1.bf16.msra.mxu0 %v2069
    %2098 = vmatprep.subr.bf16.mxu0 0
    %2099 = vmatpush1.bf16.msra.mxu0 %v2068
    %2100 = vmatprep.subr.bf16.mxu0 0
    %2101 = vmatpush2.bf16.msra.mxu0 0
    %2102 = vmatprep.subr.bf16.mxu0 0
    %2103 = vmatpush2.bf16.msra.mxu0 0
    %2104 = vmatprep.subr.bf16.mxu0 0
    %2105 = vmatpush2.bf16.msra.mxu0 0
    %2106 = vmatprep.subr.bf16.mxu0 0
    %2107 = vmatpush2.bf16.msra.mxu0 0
    %2108 = vmatprep.subr.bf16.mxu0 0
    %2109 = vmatpush2.bf16.msra.mxu0 0
    %2110 = vmatprep.subr.bf16.mxu0 0
    %2111 = vmatpush2.bf16.msra.mxu0 0
    %2112 = vmatprep.subr.bf16.mxu0 0
    %2113 = vmatpush2.bf16.msra.mxu0 0
    %2114 = vmatprep.subr.bf16.mxu0 0
    %2115 = vmatpush2.bf16.msra.mxu0 0
    %2116 = vmatprep.mubr.bf16.mxu0 0
    %2117 = vmatmul.mubr.bf16.gmra.mxu0 %v2012
    %v2118 = vpop.f32.mrf.mxu0
    %v2119 = vadd.f32 %v2034, %v2118
    %v2120 = vpop.f32.mrf.mxu0
    %v2121 = vpop.f32.mrf.mxu0
    %v2122 = vpop.f32.mrf.mxu0
    %2123 = vdwg.mxu0
    %v2124 = vmax.f32 %v2119, 0.0
    %v2125 = vpack.c.bf16 %v2124, %v2124
    %v2126 = vld [vmem:[%s10] sm:$0xf]
    %v2127 = vld [vmem:[%s10 + $0x4] sm:$0xf]
    %v2128 = vld [vmem:[%s10 + $0x8] sm:$0xf]
    %v2129 = vld [vmem:[%s10 + $0xc] sm:$0xf]
    %v2130 = vld [vmem:[%s10 + $0x10] sm:$0xf]
    %v2131 = vld [vmem:[%s10 + $0x14] sm:$0xf]
    %v2132 = vld [vmem:[%s10 + $0x18] sm:$0xf]
    %v2133 = vld [vmem:[%s10 + $0x1c] sm:$0xf]
    %v2134 = vld [vmem:[%s10 + $0x20] sm:$0xf]
    %v2135 = vld [vmem:[%s10 + $0x24] sm:$0xf]
    %v2136 = vld [vmem:[%s10 + $0x28] sm:$0xf]
    %v2137 = vld [vmem:[%s10 + $0x2c] sm:$0xf]
    %v2138 = vld [vmem:[%s10 + $0x30] sm:$0xf]
    %v2139 = vld [vmem:[%s10 + $0x34] sm:$0xf]
    %v2140 = vld [vmem:[%s10 + $0x38] sm:$0xf]
    %v2141 = vld [vmem:[%s10 + $0x3c] sm:$0xf]
    %v2142 = vld [vmem:[%s11] sm:$0x1]
    %v2144 = vlaneseq
    %v2145 = vshrl.u32 %v2144, 7
    %v2146 = vsub.s32 0, %v2145
    %v2147 = vrot.slane %v2142, %v2146
    %v2165 = vunpack.c.l.b16 %v2126
    %v2166 = vunpack.c.l.b16 %v2127
    %v2167 = vunpack.c.l.b16 %v2128
    %v2168 = vunpack.c.l.b16 %v2129
    %v2169 = vunpack.c.l.b16 %v2130
    %v2170 = vunpack.c.l.b16 %v2131
    %v2171 = vunpack.c.l.b16 %v2132
    %v2172 = vunpack.c.l.b16 %v2133
    %v2173 = vunpack.c.l.b16 %v2134
    %v2174 = vunpack.c.l.b16 %v2135
    %v2175 = vunpack.c.l.b16 %v2136
    %v2176 = vunpack.c.l.b16 %v2137
    %v2177 = vunpack.c.l.b16 %v2138
    %v2178 = vunpack.c.l.b16 %v2139
    %v2179 = vunpack.c.l.b16 %v2140
    %v2180 = vunpack.c.l.b16 %v2141
    %v2181 = vpack.c.b16 %v2166, %v2165
    %v2182 = vpack.c.b16 %v2168, %v2167
    %v2183 = vpack.c.b16 %v2170, %v2169
    %v2184 = vpack.c.b16 %v2172, %v2171
    %v2185 = vpack.c.b16 %v2174, %v2173
    %v2186 = vpack.c.b16 %v2176, %v2175
    %v2187 = vpack.c.b16 %v2178, %v2177
    %v2188 = vpack.c.b16 %v2180, %v2179
    %2197 = vmatprep.subr.bf16.mxu0 0
    %2198 = vmatpush1.bf16.msra.mxu0 %v2188
    %2199 = vmatprep.subr.bf16.mxu0 0
    %2200 = vmatpush1.bf16.msra.mxu0 %v2187
    %2201 = vmatprep.subr.bf16.mxu0 0
    %2202 = vmatpush1.bf16.msra.mxu0 %v2186
    %2203 = vmatprep.subr.bf16.mxu0 0
    %2204 = vmatpush1.bf16.msra.mxu0 %v2185
    %2205 = vmatprep.subr.bf16.mxu0 0
    %2206 = vmatpush1.bf16.msra.mxu0 %v2184
    %2207 = vmatprep.subr.bf16.mxu0 0
    %2208 = vmatpush1.bf16.msra.mxu0 %v2183
    %2209 = vmatprep.subr.bf16.mxu0 0
    %2210 = vmatpush1.bf16.msra.mxu0 %v2182
    %2211 = vmatprep.subr.bf16.mxu0 0
    %2212 = vmatpush1.bf16.msra.mxu0 %v2181
    %2213 = vmatprep.subr.bf16.mxu0 0
    %2214 = vmatpush2.bf16.msra.mxu0 0
    %2215 = vmatprep.subr.bf16.mxu0 0
    %2216 = vmatpush2.bf16.msra.mxu0 0
    %2217 = vmatprep.subr.bf16.mxu0 0
    %2218 = vmatpush2.bf16.msra.mxu0 0
    %2219 = vmatprep.subr.bf16.mxu0 0
    %2220 = vmatpush2.bf16.msra.mxu0 0
    %2221 = vmatprep.subr.bf16.mxu0 0
    %2222 = vmatpush2.bf16.msra.mxu0 0
    %2223 = vmatprep.subr.bf16.mxu0 0
    %2224 = vmatpush2.bf16.msra.mxu0 0
    %2225 = vmatprep.subr.bf16.mxu0 0
    %2226 = vmatpush2.bf16.msra.mxu0 0
    %2227 = vmatprep.subr.bf16.mxu0 0
    %2228 = vmatpush2.bf16.msra.mxu0 0
    %2229 = vmatprep.mubr.bf16.mxu0 0
    %2230 = vmatmul.mubr.bf16.gmra.mxu0 %v2125
    %v2231 = vpop.f32.mrf.mxu0
    %v2232 = vadd.f32 %v2147, %v2231
    %v2233 = vpop.f32.mrf.mxu0
    %v2234 = vpop.f32.mrf.mxu0
    %v2235 = vpop.f32.mrf.mxu0
    %2236 = vdwg.mxu0
    %v2237 = vmax.f32 %v2232, 0.0
    %v2238 = vpack.c.bf16 %v2237, %v2237
    %v2239 = vld [vmem:[#allocation15] sm:$0xf]
    %v2240 = vld [vmem:[#allocation15 + $0x4] sm:$0xf]
    %v2241 = vld [vmem:[#allocation15 + $0x8] sm:$0xf]
    %v2242 = vld [vmem:[#allocation15 + $0xc] sm:$0xf]
    %v2243 = vld [vmem:[#allocation15 + $0x10] sm:$0xf]
    %v2244 = vld [vmem:[#allocation15 + $0x14] sm:$0xf]
    %v2245 = vld [vmem:[#allocation15 + $0x18] sm:$0xf]
    %v2246 = vld [vmem:[#allocation15 + $0x1c] sm:$0xf]
    %v2247 = vld [vmem:[#allocation15 + $0x20] sm:$0xf]
    %v2248 = vld [vmem:[#allocation15 + $0x24] sm:$0xf]
    %v2249 = vld [vmem:[#allocation15 + $0x28] sm:$0xf]
    %v2250 = vld [vmem:[#allocation15 + $0x2c] sm:$0xf]
    %v2251 = vld [vmem:[#allocation15 + $0x30] sm:$0xf]
    %v2252 = vld [vmem:[#allocation15 + $0x34] sm:$0xf]
    %v2253 = vld [vmem:[#allocation15 + $0x38] sm:$0xf]
    %v2254 = vld [vmem:[#allocation15 + $0x3c] sm:$0xf]
    %v2255 = vld [vmem:[%s13] sm:$0x1]
    %v2257 = vlaneseq
    %v2258 = vshrl.u32 %v2257, 7
    %v2259 = vsub.s32 0, %v2258
    %v2260 = vrot.slane %v2255, %v2259
    %v2278 = vunpack.c.l.b16 %v2239
    %v2279 = vunpack.c.l.b16 %v2240
    %v2280 = vunpack.c.l.b16 %v2241
    %v2281 = vunpack.c.l.b16 %v2242
    %v2282 = vunpack.c.l.b16 %v2243
    %v2283 = vunpack.c.l.b16 %v2244
    %v2284 = vunpack.c.l.b16 %v2245
    %v2285 = vunpack.c.l.b16 %v2246
    %v2286 = vunpack.c.l.b16 %v2247
    %v2287 = vunpack.c.l.b16 %v2248
    %v2288 = vunpack.c.l.b16 %v2249
    %v2289 = vunpack.c.l.b16 %v2250
    %v2290 = vunpack.c.l.b16 %v2251
    %v2291 = vunpack.c.l.b16 %v2252
    %v2292 = vunpack.c.l.b16 %v2253
    %v2293 = vunpack.c.l.b16 %v2254
    %v2294 = vpack.c.b16 %v2279, %v2278
    %v2295 = vpack.c.b16 %v2281, %v2280
    %v2296 = vpack.c.b16 %v2283, %v2282
    %v2297 = vpack.c.b16 %v2285, %v2284
    %v2298 = vpack.c.b16 %v2287, %v2286
    %v2299 = vpack.c.b16 %v2289, %v2288
    %v2300 = vpack.c.b16 %v2291, %v2290
    %v2301 = vpack.c.b16 %v2293, %v2292
    %2310 = vmatprep.subr.bf16.mxu0 0
    %2311 = vmatpush1.bf16.msra.mxu0 %v2301
    %2312 = vmatprep.subr.bf16.mxu0 0
    %2313 = vmatpush1.bf16.msra.mxu0 %v2300
    %2314 = vmatprep.subr.bf16.mxu0 0
    %2315 = vmatpush1.bf16.msra.mxu0 %v2299
    %2316 = vmatprep.subr.bf16.mxu0 0
    %2317 = vmatpush1.bf16.msra.mxu0 %v2298
    %2318 = vmatprep.subr.bf16.mxu0 0
    %2319 = vmatpush1.bf16.msra.mxu0 %v2297
    %2320 = vmatprep.subr.bf16.mxu0 0
    %2321 = vmatpush1.bf16.msra.mxu0 %v2296
    %2322 = vmatprep.subr.bf16.mxu0 0
    %2323 = vmatpush1.bf16.msra.mxu0 %v2295
    %2324 = vmatprep.subr.bf16.mxu0 0
    %2325 = vmatpush1.bf16.msra.mxu0 %v2294
    %2326 = vmatprep.subr.bf16.mxu0 0
    %2327 = vmatpush2.bf16.msra.mxu0 0
    %2328 = vmatprep.subr.bf16.mxu0 0
    %2329 = vmatpush2.bf16.msra.mxu0 0
    %2330 = vmatprep.subr.bf16.mxu0 0
    %2331 = vmatpush2.bf16.msra.mxu0 0
    %2332 = vmatprep.subr.bf16.mxu0 0
    %2333 = vmatpush2.bf16.msra.mxu0 0
    %2334 = vmatprep.subr.bf16.mxu0 0
    %2335 = vmatpush2.bf16.msra.mxu0 0
    %2336 = vmatprep.subr.bf16.mxu0 0
    %2337 = vmatpush2.bf16.msra.mxu0 0
    %2338 = vmatprep.subr.bf16.mxu0 0
    %2339 = vmatpush2.bf16.msra.mxu0 0
    %2340 = vmatprep.subr.bf16.mxu0 0
    %2341 = vmatpush2.bf16.msra.mxu0 0
    %2342 = vmatprep.mubr.bf16.mxu0 0
    %2343 = vmatmul.mubr.bf16.gmra.mxu0 %v2238
    %v2344 = vpop.f32.mrf.mxu0
    %v2345 = vadd.f32 %v2260, %v2344
    %v2346 = vpop.f32.mrf.mxu0
    %v2347 = vpop.f32.mrf.mxu0
    %v2348 = vpop.f32.mrf.mxu0
    %2349 = vdwg.mxu0
    %v2350 = vxor.u32 %v2345, 2147483648
    %v2351 = vmul.f32 %v2350, 1.442695
    %v2352 = vpow.pop %v2351
    %v2353 = vadd.f32 %v2352, 1.0
    %v2354 = vrcp.pop %v2353
    %v2355 = vmul.f32 1.0, %v2354
    %2356 = vst [vmem:[#allocation17] sm:$0xff] %v2355
    // Predicated region
    $region90: #{tpu_custom_call.1} parent=1 // pred_check
      _
    $region91: #{tpu_custom_call.1} parent=1 // pred_check_branch
      %2358 = sbr.rel (0) target = $region93
    $region92: #{tpu_custom_call.1} parent=1 // pred_region
      %s2360 = ssub.s32 128, 128
      %2361 = vsyncadd [#allocation5], %s2360
      %s2363 = sshll.u32 [#allocation17], 4
      %s2364 = int_to_ptr.vmem [resolvable:$true] %s2363
      %2366 = dma.vmem_to_hbm [thread:$0]  %s2364, 128, %s14, [#allocation5]
    $region93: #{tpu_custom_call.1} parent=1 // pred_fallthru
      _
    // Predicated region
    $region94: #{tpu_custom_call.1} parent=1 // pred_check
      _
    $region95: #{tpu_custom_call.1} parent=1 // pred_check_branch
      %2368 = sbr.rel (0) target = $region97
    $region96: #{tpu_custom_call.1} parent=1 // pred_region
      %2369 = dma.done [#allocation5], 128
    $region97: #{tpu_custom_call.1} parent=1 // pred_fallthru
      _
    %2370 = vsyncpa [#allocation4], 1
    %2371 = vsyncpa [#allocation7], 1
    %2372 = vsyncpa [#allocation10], 1
    %2373 = vsyncpa [#allocation13], 1
    %2374 = vsyncpa [#allocation16], 1
    %2375 = vsyncpa [#allocation5], 1

</llo_original>
